<compile_context>
chip_gen: v7x
topology: tpu7x:2x2x1
jax: 0.10.0
libtpu: 0.0.40
codegen_flags: <defaults>
</compile_context>

<pallas_src>
import math

import jax
import jax.numpy as jnp
from jax.experimental import pallas as pl
from jax.experimental.pallas import tpu as pltpu

# Module hyper-parameters (from the PyTorch script)
HIDDEN = 20
INPUT = 1
OUTPUT = 1
DT = 1.0
EPS = 1e-5       # NeuroFlexCell.epsilon
LN_EPS = 1e-5    # nn.LayerNorm default eps


def neuroflex_kernel(
    xg_ref,      # (S, B, 4H)  precomputed x @ W_ih^T + b_ih + b_hh, gate order [i|f|g|o]
    whh_ref,     # (H, 4H)     W_hh^T, gate columns [i|f|g|o]
    scale_ref,   # (S, B, H)   precomputed exp(-(w_tau + sig(x))*dT + eps) * sig(-x)
    A_ref,       # (1, H)
    ln_g_ref,    # (1, H)      LayerNorm gamma
    ln_b_ref,    # (1, H)      LayerNorm beta
    w_out_ref,   # (1, H)      output_layer weight row (O = 1)
    b_out_ref,   # (1, 1)
    out_ref,     # (S, B)      per-step scalar outputs (reshaped to (S,B,O) outside)
    h_out_ref,   # (B, H)      final hidden
    c_out_ref,   # (B, H)      final cell
):
    S, B, _ = xg_ref.shape
    H = A_ref.shape[-1]

    # Hoist all loop-invariant loads out of the recurrence.
    whh = whh_ref[...]          # (H, 4H)
    A = A_ref[...]              # (1, H)
    ln_g = ln_g_ref[...]        # (1, H)
    ln_b = ln_b_ref[...]        # (1, H)
    w_out = w_out_ref[...]      # (1, H)
    b_out = b_out_ref[...]      # (1, 1)

    # (h, c) live in registers across the (statically unrolled) time loop.
    h = jnp.zeros((B, H), jnp.float32)
    c = jnp.zeros((B, H), jnp.float32)
    hs = []

    for t in range(S):  # S is small and static -> fully unrolled recurrence
        # ---- nn.LSTMCell with a single fused recurrent matmul per step.
        gates = xg_ref[t] + jnp.dot(h, whh, preferred_element_type=jnp.float32)  # (B, 4H)
        # One EUP sigmoid pass over the packed gates (i|f|g|o); the g columns of
        # `sg` are unused (tanh is taken from the raw gates instead).
        sg = jax.nn.sigmoid(gates)
        i_g = sg[:, 0:H]
        f_g = sg[:, H:2 * H]
        o_g = sg[:, 3 * H:4 * H]
        g_g = jnp.tanh(gates[:, 2 * H:3 * H])
        c = f_g * c + i_g * g_g
        x_lstm = o_g * jnp.tanh(c)                                                # (B, H)

        # ---- liquid-time-constant mixing (x-dependent scale precomputed).
        xc = (x_lstm - A) * scale_ref[t] + A + h                                  # (B, H)

        # ---- LayerNorm over hidden dim (biased variance, like nn.LayerNorm).
        mu = jnp.mean(xc, axis=-1, keepdims=True)
        var = jnp.mean((xc - mu) ** 2, axis=-1, keepdims=True)
        h = (xc - mu) * jax.lax.rsqrt(var + LN_EPS) * ln_g + ln_b
        hs.append(h)

    # ---- output_layer (Linear, O=1): one batched VPU multiply + lane reduction
    # over all timesteps, single lane-dense store.
    h_all = jnp.stack(hs, axis=0)                                                 # (S, B, H)
    out_ref[...] = jnp.sum(h_all * w_out, axis=-1) + b_out                        # (S, B)

    # Write state exactly once.
    h_out_ref[...] = h
    c_out_ref[...] = c


def neuroflex_forward(x, p):
    """x: (S, B, I) float32. p: PyTorch-layout parameter dict."""
    S, B, I = x.shape
    H, O = HIDDEN, OUTPUT
    assert I == INPUT

    # ---- plain-JAX repack / precompute of everything independent of the recurrence.
    w_ih_row = p["w_ih"][:, 0]                         # (4H,)   since I == 1
    bias4 = p["b_ih"] + p["b_hh"]                      # (4H,)
    whh4 = p["w_hh"].T                                 # (H, 4H), gate cols [i|f|g|o]

    x2d = x[:, :, 0]                                   # (S, B)
    # input-gate contribution for all timesteps: x @ W_ih^T + b  (outer product, I=1)
    xg = x2d[:, :, None] * w_ih_row[None, None, :] + bias4[None, None, :]   # (S, B, 4H)

    # liquid-time-constant x-dependent / constant transcendentals, batched over S
    sig_x = jax.nn.sigmoid(x2d)                        # (S, B)
    sig_neg_x = jax.nn.sigmoid(-x2d)                   # (S, B)
    exponent = -(p["w_tau"][None, None, :] + sig_x[:, :, None]) * DT + EPS  # (S, B, H)
    scale = jnp.exp(exponent) * sig_neg_x[:, :, None]                       # (S, B, H)

    A2 = p["A"].reshape(1, H)
    ln_g2 = p["ln_g"].reshape(1, H)
    ln_b2 = p["ln_b"].reshape(1, H)
    w_out_row = p["w_out"].reshape(1, H)               # (O, H) with O = 1
    b_out2 = p["b_out"].reshape(1, 1)

    def full(shape):
        n = len(shape)
        return pl.BlockSpec(shape, lambda i, _n=n: (0,) * _n)

    outs = pl.pallas_call(
        neuroflex_kernel,
        out_shape=(
            jax.ShapeDtypeStruct((S, B), jnp.float32),
            jax.ShapeDtypeStruct((B, H), jnp.float32),
            jax.ShapeDtypeStruct((B, H), jnp.float32),
        ),
        grid=(1,),
        in_specs=[
            full((S, B, 4 * H)),
            full((H, 4 * H)),
            full((S, B, H)),
            full((1, H)),
            full((1, H)),
            full((1, H)),
            full((1, H)),
            full((1, 1)),
        ],
        out_specs=(
            full((S, B)),
            full((B, H)),
            full((B, H)),
        ),
        compiler_params=pltpu.CompilerParams(dimension_semantics=("arbitrary",)),
    )(xg, whh4, scale, A2, ln_g2, ln_b2, w_out_row, b_out2)

    out2d, h_t, c_t = outs
    outputs = out2d.reshape(S, B, O)
    return outputs, (h_t, c_t)


neuroflex_forward_jit = jax.jit(neuroflex_forward)


def init_params(key):
    """Deterministic parameter init matching the PyTorch module's shapes."""
    H, I, O = HIDDEN, INPUT, OUTPUT
    ks = jax.random.split(key, 8)
    bound = 1.0 / math.sqrt(H)
    u = lambda k, shape, lo, hi: jax.random.uniform(
        k, shape, minval=lo, maxval=hi, dtype=jnp.float32
    )
    return {
        "w_ih": u(ks[0], (4 * H, I), -bound, bound),
        "w_hh": u(ks[1], (4 * H, H), -bound, bound),
        "b_ih": u(ks[2], (4 * H,), -bound, bound),
        "b_hh": u(ks[3], (4 * H,), -bound, bound),
        "A": u(ks[4], (H,), -0.1, 0.1),
        "w_tau": u(ks[5], (H,), -0.1, 0.1),
        "ln_g": jnp.ones((H,), jnp.float32),
        "ln_b": jnp.zeros((H,), jnp.float32),
        "w_out": u(ks[6], (O, H), -bound, bound),
        "b_out": u(ks[7], (O,), -bound, bound),
    }


def reference_forward(x, p):
    """Pure-JAX replica of the PyTorch forward (for correctness check)."""
    H = HIDDEN
    S, B, _ = x.shape
    h = jnp.zeros((B, H), jnp.float32)
    c = jnp.zeros((B, H), jnp.float32)
    outs = []
    for t in range(S):
        xt = x[t]
        gates = xt @ p["w_ih"].T + h @ p["w_hh"].T + p["b_ih"] + p["b_hh"]
        i_g = jax.nn.sigmoid(gates[:, 0:H])
        f_g = jax.nn.sigmoid(gates[:, H:2 * H])
        g_g = jnp.tanh(gates[:, 2 * H:3 * H])
        o_g = jax.nn.sigmoid(gates[:, 3 * H:4 * H])
        c = f_g * c + i_g * g_g
        x_lstm = o_g * jnp.tanh(c)
        exponent = -(p["w_tau"] + jax.nn.sigmoid(xt)) * DT + EPS
        xc = (x_lstm - p["A"]) * jnp.exp(exponent) * jax.nn.sigmoid(-xt) + p["A"] + h
        mu = xc.mean(-1, keepdims=True)
        var = ((xc - mu) ** 2).mean(-1, keepdims=True)
        xc = (xc - mu) / jnp.sqrt(var + LN_EPS) * p["ln_g"] + p["ln_b"]
        h = xc
        outs.append(xc @ p["w_out"].T + p["b_out"])
    return jnp.stack(outs, 0), (h, c)


if __name__ == "__main__":
    key = jax.random.PRNGKey(0)
    k_param, k_x = jax.random.split(key)

    seq_len, batch = 8, 16
    x = jax.random.normal(k_x, (seq_len, batch, INPUT), dtype=jnp.float32)
    params = init_params(k_param)

    outputs, (h_t, c_t) = neuroflex_forward_jit(x, params)
    jax.block_until_ready((outputs, h_t, c_t))

    ref_out, (ref_h, ref_c) = reference_forward(x, params)
    assert outputs.shape == (seq_len, batch, OUTPUT)
    assert h_t.shape == (batch, HIDDEN) and c_t.shape == (batch, HIDDEN)
    assert jnp.allclose(outputs, ref_out, rtol=1e-4, atol=1e-4)
    assert jnp.allclose(h_t, ref_h, rtol=1e-4, atol=1e-4)
    assert jnp.allclose(c_t, ref_c, rtol=1e-4, atol=1e-4)

    # TODO(synk): update_weights (manual SGD step) is training-side and not translated.
    print("KERNEL_OK")
</pallas_src>

<mosaic_0001>
module attributes {stable_mosaic.version = 11 : i64} {
  func.func @neuroflex_kernel(%arg0: i32, %arg1: memref<8x16x80xf32, #tpu.memory_space<vmem>>, %arg2: memref<20x80xf32, #tpu.memory_space<vmem>>, %arg3: memref<8x16x20xf32, #tpu.memory_space<vmem>>, %arg4: memref<1x20xf32, #tpu.memory_space<vmem>>, %arg5: memref<1x20xf32, #tpu.memory_space<vmem>>, %arg6: memref<1x20xf32, #tpu.memory_space<vmem>>, %arg7: memref<1x20xf32, #tpu.memory_space<vmem>>, %arg8: memref<1x1xf32, #tpu.memory_space<vmem>>, %arg9: memref<8x16xf32, #tpu.memory_space<vmem>>, %arg10: memref<16x20xf32, #tpu.memory_space<vmem>>, %arg11: memref<16x20xf32, #tpu.memory_space<vmem>>) attributes {dimension_semantics = [#tpu.dimension_semantics<arbitrary>], iteration_bounds = array<i64: 1>, scalar_prefetch = 0 : i64, scratch_operands = 0 : i64, tpu.core_type = #tpu.core_type<tc>, window_params = [{pipeline_mode = #tpu.pipeline_mode<synchronous>, transform_indices = @transform_0, window_bounds = array<i64: 8, 16, 80>}, {pipeline_mode = #tpu.pipeline_mode<synchronous>, transform_indices = @transform_1, window_bounds = array<i64: 20, 80>}, {pipeline_mode = #tpu.pipeline_mode<synchronous>, transform_indices = @transform_2, window_bounds = array<i64: 8, 16, 20>}, {pipeline_mode = #tpu.pipeline_mode<synchronous>, transform_indices = @transform_3, window_bounds = array<i64: 1, 20>}, {pipeline_mode = #tpu.pipeline_mode<synchronous>, transform_indices = @transform_4, window_bounds = array<i64: 1, 20>}, {pipeline_mode = #tpu.pipeline_mode<synchronous>, transform_indices = @transform_5, window_bounds = array<i64: 1, 20>}, {pipeline_mode = #tpu.pipeline_mode<synchronous>, transform_indices = @transform_6, window_bounds = array<i64: 1, 20>}, {pipeline_mode = #tpu.pipeline_mode<synchronous>, transform_indices = @transform_7, window_bounds = array<i64: 1, 1>}, {pipeline_mode = #tpu.pipeline_mode<synchronous>, transform_indices = @transform_8, window_bounds = array<i64: 8, 16>}, {pipeline_mode = #tpu.pipeline_mode<synchronous>, transform_indices = @transform_9, window_bounds = array<i64: 16, 20>}, {pipeline_mode = #tpu.pipeline_mode<synchronous>, transform_indices = @transform_10, window_bounds = array<i64: 16, 20>}]} {
    %c0 = arith.constant 0 : index
    %c0_0 = arith.constant 0 : index
    %0 = vector.load %arg2[%c0, %c0_0] : memref<20x80xf32, #tpu.memory_space<vmem>>, vector<20x80xf32>
    %c0_1 = arith.constant 0 : index
    %c0_2 = arith.constant 0 : index
    %1 = vector.load %arg4[%c0_1, %c0_2] : memref<1x20xf32, #tpu.memory_space<vmem>>, vector<1x20xf32>
    %c0_3 = arith.constant 0 : index
    %c0_4 = arith.constant 0 : index
    %2 = vector.load %arg5[%c0_3, %c0_4] : memref<1x20xf32, #tpu.memory_space<vmem>>, vector<1x20xf32>
    %c0_5 = arith.constant 0 : index
    %c0_6 = arith.constant 0 : index
    %3 = vector.load %arg6[%c0_5, %c0_6] : memref<1x20xf32, #tpu.memory_space<vmem>>, vector<1x20xf32>
    %c0_7 = arith.constant 0 : index
    %c0_8 = arith.constant 0 : index
    %4 = vector.load %arg7[%c0_7, %c0_8] : memref<1x20xf32, #tpu.memory_space<vmem>>, vector<1x20xf32>
    %c0_9 = arith.constant 0 : index
    %c0_10 = arith.constant 0 : index
    %5 = vector.load %arg8[%c0_9, %c0_10] : memref<1x1xf32, #tpu.memory_space<vmem>>, vector<1x1xf32>
    %cst = arith.constant 0.000000e+00 : f32
    %6 = vector.broadcast %cst : f32 to vector<16x20xf32>
    %cst_11 = arith.constant 0.000000e+00 : f32
    %7 = vector.broadcast %cst_11 : f32 to vector<16x20xf32>
    %c0_12 = arith.constant 0 : index
    %c0_13 = arith.constant 0 : index
    %c0_14 = arith.constant 0 : index
    %8 = vector.load %arg1[%c0_12, %c0_13, %c0_14] : memref<8x16x80xf32, #tpu.memory_space<vmem>>, vector<1x16x80xf32>
    %9 = vector.shape_cast %8 : vector<1x16x80xf32> to vector<16x80xf32>
    %cst_15 = arith.constant dense<0.000000e+00> : vector<16x80xf32>
    %10 = tpu.matmul %6, %0, %cst_15 {dimension_numbers = #tpu.dot_dimension_numbers<[1], [0], [0], [1], [0, 0, 1, 1], [], []>} : vector<16x20xf32>, vector<20x80xf32>, vector<16x80xf32> -> vector<16x80xf32>
    %11 = arith.addf %9, %10 : vector<16x80xf32>
    %12 = arith.negf %11 : vector<16x80xf32>
    %13 = math.exp %12 : vector<16x80xf32>
    %cst_16 = arith.constant 1.000000e+00 : f32
    %14 = vector.broadcast %cst_16 : f32 to vector<16x80xf32>
    %15 = arith.addf %14, %13 : vector<16x80xf32>
    %16 = arith.divf %14, %15 : vector<16x80xf32>
    %17 = vector.extract_strided_slice %16 {offsets = [0, 0], sizes = [16, 20], strides = [1, 1]} : vector<16x80xf32> to vector<16x20xf32>
    %18 = vector.extract_strided_slice %16 {offsets = [0, 20], sizes = [16, 20], strides = [1, 1]} : vector<16x80xf32> to vector<16x20xf32>
    %19 = vector.extract_strided_slice %16 {offsets = [0, 60], sizes = [16, 20], strides = [1, 1]} : vector<16x80xf32> to vector<16x20xf32>
    %20 = vector.extract_strided_slice %11 {offsets = [0, 40], sizes = [16, 20], strides = [1, 1]} : vector<16x80xf32> to vector<16x20xf32>
    %21 = math.tanh %20 : vector<16x20xf32>
    %22 = arith.mulf %18, %7 : vector<16x20xf32>
    %23 = arith.mulf %17, %21 : vector<16x20xf32>
    %24 = arith.addf %22, %23 : vector<16x20xf32>
    %25 = math.tanh %24 : vector<16x20xf32>
    %26 = arith.mulf %19, %25 : vector<16x20xf32>
    %27 = vector.broadcast %1 : vector<1x20xf32> to vector<16x20xf32>
    %28 = arith.subf %26, %27 : vector<16x20xf32>
    %c0_17 = arith.constant 0 : index
    %c0_18 = arith.constant 0 : index
    %c0_19 = arith.constant 0 : index
    %29 = vector.load %arg3[%c0_17, %c0_18, %c0_19] : memref<8x16x20xf32, #tpu.memory_space<vmem>>, vector<1x16x20xf32>
    %30 = vector.shape_cast %29 : vector<1x16x20xf32> to vector<16x20xf32>
    %31 = arith.mulf %28, %30 : vector<16x20xf32>
    %32 = vector.broadcast %1 : vector<1x20xf32> to vector<16x20xf32>
    %33 = arith.addf %31, %32 : vector<16x20xf32>
    %34 = arith.addf %33, %6 : vector<16x20xf32>
    %cst_20 = arith.constant dense<0.000000e+00> : vector<16xf32>
    %35 = vector.multi_reduction <add>, %34, %cst_20 [1] : vector<16x20xf32> to vector<16xf32>
    %36 = vector.shape_cast %35 : vector<16xf32> to vector<16x1xf32>
    %cst_21 = arith.constant 2.000000e+01 : f32
    %37 = vector.broadcast %cst_21 : f32 to vector<16x1xf32>
    %38 = arith.divf %36, %37 : vector<16x1xf32>
    %39 = vector.broadcast %38 : vector<16x1xf32> to vector<16x20xf32>
    %40 = arith.subf %34, %39 : vector<16x20xf32>
    %41 = arith.mulf %40, %40 : vector<16x20xf32>
    %cst_22 = arith.constant dense<0.000000e+00> : vector<16xf32>
    %42 = vector.multi_reduction <add>, %41, %cst_22 [1] : vector<16x20xf32> to vector<16xf32>
    %43 = vector.shape_cast %42 : vector<16xf32> to vector<16x1xf32>
    %cst_23 = arith.constant 2.000000e+01 : f32
    %44 = vector.broadcast %cst_23 : f32 to vector<16x1xf32>
    %45 = arith.divf %43, %44 : vector<16x1xf32>
    %46 = vector.broadcast %38 : vector<16x1xf32> to vector<16x20xf32>
    %47 = arith.subf %34, %46 : vector<16x20xf32>
    %cst_24 = arith.constant 9.99999974E-6 : f32
    %48 = vector.broadcast %cst_24 : f32 to vector<16x1xf32>
    %49 = arith.addf %45, %48 : vector<16x1xf32>
    %50 = math.rsqrt %49 : vector<16x1xf32>
    %51 = vector.broadcast %50 : vector<16x1xf32> to vector<16x20xf32>
    %52 = arith.mulf %47, %51 : vector<16x20xf32>
    %53 = vector.broadcast %2 : vector<1x20xf32> to vector<16x20xf32>
    %54 = arith.mulf %52, %53 : vector<16x20xf32>
    %55 = vector.broadcast %3 : vector<1x20xf32> to vector<16x20xf32>
    %56 = arith.addf %54, %55 : vector<16x20xf32>
    %c1 = arith.constant 1 : index
    %c0_25 = arith.constant 0 : index
    %c0_26 = arith.constant 0 : index
    %57 = vector.load %arg1[%c1, %c0_25, %c0_26] : memref<8x16x80xf32, #tpu.memory_space<vmem>>, vector<1x16x80xf32>
    %58 = vector.shape_cast %57 : vector<1x16x80xf32> to vector<16x80xf32>
    %cst_27 = arith.constant dense<0.000000e+00> : vector<16x80xf32>
    %59 = tpu.matmul %56, %0, %cst_27 {dimension_numbers = #tpu.dot_dimension_numbers<[1], [0], [0], [1], [0, 0, 1, 1], [], []>} : vector<16x20xf32>, vector<20x80xf32>, vector<16x80xf32> -> vector<16x80xf32>
    %60 = arith.addf %58, %59 : vector<16x80xf32>
    %61 = arith.negf %60 : vector<16x80xf32>
    %62 = math.exp %61 : vector<16x80xf32>
    %cst_28 = arith.constant 1.000000e+00 : f32
    %63 = vector.broadcast %cst_28 : f32 to vector<16x80xf32>
    %64 = arith.addf %63, %62 : vector<16x80xf32>
    %65 = arith.divf %63, %64 : vector<16x80xf32>
    %66 = vector.extract_strided_slice %65 {offsets = [0, 0], sizes = [16, 20], strides = [1, 1]} : vector<16x80xf32> to vector<16x20xf32>
    %67 = vector.extract_strided_slice %65 {offsets = [0, 20], sizes = [16, 20], strides = [1, 1]} : vector<16x80xf32> to vector<16x20xf32>
    %68 = vector.extract_strided_slice %65 {offsets = [0, 60], sizes = [16, 20], strides = [1, 1]} : vector<16x80xf32> to vector<16x20xf32>
    %69 = vector.extract_strided_slice %60 {offsets = [0, 40], sizes = [16, 20], strides = [1, 1]} : vector<16x80xf32> to vector<16x20xf32>
    %70 = math.tanh %69 : vector<16x20xf32>
    %71 = arith.mulf %67, %24 : vector<16x20xf32>
    %72 = arith.mulf %66, %70 : vector<16x20xf32>
    %73 = arith.addf %71, %72 : vector<16x20xf32>
    %74 = math.tanh %73 : vector<16x20xf32>
    %75 = arith.mulf %68, %74 : vector<16x20xf32>
    %76 = vector.broadcast %1 : vector<1x20xf32> to vector<16x20xf32>
    %77 = arith.subf %75, %76 : vector<16x20xf32>
    %c1_29 = arith.constant 1 : index
    %c0_30 = arith.constant 0 : index
    %c0_31 = arith.constant 0 : index
    %78 = vector.load %arg3[%c1_29, %c0_30, %c0_31] : memref<8x16x20xf32, #tpu.memory_space<vmem>>, vector<1x16x20xf32>
    %79 = vector.shape_cast %78 : vector<1x16x20xf32> to vector<16x20xf32>
    %80 = arith.mulf %77, %79 : vector<16x20xf32>
    %81 = vector.broadcast %1 : vector<1x20xf32> to vector<16x20xf32>
    %82 = arith.addf %80, %81 : vector<16x20xf32>
    %83 = arith.addf %82, %56 : vector<16x20xf32>
    %cst_32 = arith.constant dense<0.000000e+00> : vector<16xf32>
    %84 = vector.multi_reduction <add>, %83, %cst_32 [1] : vector<16x20xf32> to vector<16xf32>
    %85 = vector.shape_cast %84 : vector<16xf32> to vector<16x1xf32>
    %cst_33 = arith.constant 2.000000e+01 : f32
    %86 = vector.broadcast %cst_33 : f32 to vector<16x1xf32>
    %87 = arith.divf %85, %86 : vector<16x1xf32>
    %88 = vector.broadcast %87 : vector<16x1xf32> to vector<16x20xf32>
    %89 = arith.subf %83, %88 : vector<16x20xf32>
    %90 = arith.mulf %89, %89 : vector<16x20xf32>
    %cst_34 = arith.constant dense<0.000000e+00> : vector<16xf32>
    %91 = vector.multi_reduction <add>, %90, %cst_34 [1] : vector<16x20xf32> to vector<16xf32>
    %92 = vector.shape_cast %91 : vector<16xf32> to vector<16x1xf32>
    %cst_35 = arith.constant 2.000000e+01 : f32
    %93 = vector.broadcast %cst_35 : f32 to vector<16x1xf32>
    %94 = arith.divf %92, %93 : vector<16x1xf32>
    %95 = vector.broadcast %87 : vector<16x1xf32> to vector<16x20xf32>
    %96 = arith.subf %83, %95 : vector<16x20xf32>
    %cst_36 = arith.constant 9.99999974E-6 : f32
    %97 = vector.broadcast %cst_36 : f32 to vector<16x1xf32>
    %98 = arith.addf %94, %97 : vector<16x1xf32>
    %99 = math.rsqrt %98 : vector<16x1xf32>
    %100 = vector.broadcast %99 : vector<16x1xf32> to vector<16x20xf32>
    %101 = arith.mulf %96, %100 : vector<16x20xf32>
    %102 = vector.broadcast %2 : vector<1x20xf32> to vector<16x20xf32>
    %103 = arith.mulf %101, %102 : vector<16x20xf32>
    %104 = vector.broadcast %3 : vector<1x20xf32> to vector<16x20xf32>
    %105 = arith.addf %103, %104 : vector<16x20xf32>
    %c2 = arith.constant 2 : index
    %c0_37 = arith.constant 0 : index
    %c0_38 = arith.constant 0 : index
    %106 = vector.load %arg1[%c2, %c0_37, %c0_38] : memref<8x16x80xf32, #tpu.memory_space<vmem>>, vector<1x16x80xf32>
    %107 = vector.shape_cast %106 : vector<1x16x80xf32> to vector<16x80xf32>
    %cst_39 = arith.constant dense<0.000000e+00> : vector<16x80xf32>
    %108 = tpu.matmul %105, %0, %cst_39 {dimension_numbers = #tpu.dot_dimension_numbers<[1], [0], [0], [1], [0, 0, 1, 1], [], []>} : vector<16x20xf32>, vector<20x80xf32>, vector<16x80xf32> -> vector<16x80xf32>
    %109 = arith.addf %107, %108 : vector<16x80xf32>
    %110 = arith.negf %109 : vector<16x80xf32>
    %111 = math.exp %110 : vector<16x80xf32>
    %cst_40 = arith.constant 1.000000e+00 : f32
    %112 = vector.broadcast %cst_40 : f32 to vector<16x80xf32>
    %113 = arith.addf %112, %111 : vector<16x80xf32>
    %114 = arith.divf %112, %113 : vector<16x80xf32>
    %115 = vector.extract_strided_slice %114 {offsets = [0, 0], sizes = [16, 20], strides = [1, 1]} : vector<16x80xf32> to vector<16x20xf32>
    %116 = vector.extract_strided_slice %114 {offsets = [0, 20], sizes = [16, 20], strides = [1, 1]} : vector<16x80xf32> to vector<16x20xf32>
    %117 = vector.extract_strided_slice %114 {offsets = [0, 60], sizes = [16, 20], strides = [1, 1]} : vector<16x80xf32> to vector<16x20xf32>
    %118 = vector.extract_strided_slice %109 {offsets = [0, 40], sizes = [16, 20], strides = [1, 1]} : vector<16x80xf32> to vector<16x20xf32>
    %119 = math.tanh %118 : vector<16x20xf32>
    %120 = arith.mulf %116, %73 : vector<16x20xf32>
    %121 = arith.mulf %115, %119 : vector<16x20xf32>
    %122 = arith.addf %120, %121 : vector<16x20xf32>
    %123 = math.tanh %122 : vector<16x20xf32>
    %124 = arith.mulf %117, %123 : vector<16x20xf32>
    %125 = vector.broadcast %1 : vector<1x20xf32> to vector<16x20xf32>
    %126 = arith.subf %124, %125 : vector<16x20xf32>
    %c2_41 = arith.constant 2 : index
    %c0_42 = arith.constant 0 : index
    %c0_43 = arith.constant 0 : index
    %127 = vector.load %arg3[%c2_41, %c0_42, %c0_43] : memref<8x16x20xf32, #tpu.memory_space<vmem>>, vector<1x16x20xf32>
    %128 = vector.shape_cast %127 : vector<1x16x20xf32> to vector<16x20xf32>
    %129 = arith.mulf %126, %128 : vector<16x20xf32>
    %130 = vector.broadcast %1 : vector<1x20xf32> to vector<16x20xf32>
    %131 = arith.addf %129, %130 : vector<16x20xf32>
    %132 = arith.addf %131, %105 : vector<16x20xf32>
    %cst_44 = arith.constant dense<0.000000e+00> : vector<16xf32>
    %133 = vector.multi_reduction <add>, %132, %cst_44 [1] : vector<16x20xf32> to vector<16xf32>
    %134 = vector.shape_cast %133 : vector<16xf32> to vector<16x1xf32>
    %cst_45 = arith.constant 2.000000e+01 : f32
    %135 = vector.broadcast %cst_45 : f32 to vector<16x1xf32>
    %136 = arith.divf %134, %135 : vector<16x1xf32>
    %137 = vector.broadcast %136 : vector<16x1xf32> to vector<16x20xf32>
    %138 = arith.subf %132, %137 : vector<16x20xf32>
    %139 = arith.mulf %138, %138 : vector<16x20xf32>
    %cst_46 = arith.constant dense<0.000000e+00> : vector<16xf32>
    %140 = vector.multi_reduction <add>, %139, %cst_46 [1] : vector<16x20xf32> to vector<16xf32>
    %141 = vector.shape_cast %140 : vector<16xf32> to vector<16x1xf32>
    %cst_47 = arith.constant 2.000000e+01 : f32
    %142 = vector.broadcast %cst_47 : f32 to vector<16x1xf32>
    %143 = arith.divf %141, %142 : vector<16x1xf32>
    %144 = vector.broadcast %136 : vector<16x1xf32> to vector<16x20xf32>
    %145 = arith.subf %132, %144 : vector<16x20xf32>
    %cst_48 = arith.constant 9.99999974E-6 : f32
    %146 = vector.broadcast %cst_48 : f32 to vector<16x1xf32>
    %147 = arith.addf %143, %146 : vector<16x1xf32>
    %148 = math.rsqrt %147 : vector<16x1xf32>
    %149 = vector.broadcast %148 : vector<16x1xf32> to vector<16x20xf32>
    %150 = arith.mulf %145, %149 : vector<16x20xf32>
    %151 = vector.broadcast %2 : vector<1x20xf32> to vector<16x20xf32>
    %152 = arith.mulf %150, %151 : vector<16x20xf32>
    %153 = vector.broadcast %3 : vector<1x20xf32> to vector<16x20xf32>
    %154 = arith.addf %152, %153 : vector<16x20xf32>
    %c3 = arith.constant 3 : index
    %c0_49 = arith.constant 0 : index
    %c0_50 = arith.constant 0 : index
    %155 = vector.load %arg1[%c3, %c0_49, %c0_50] : memref<8x16x80xf32, #tpu.memory_space<vmem>>, vector<1x16x80xf32>
    %156 = vector.shape_cast %155 : vector<1x16x80xf32> to vector<16x80xf32>
    %cst_51 = arith.constant dense<0.000000e+00> : vector<16x80xf32>
    %157 = tpu.matmul %154, %0, %cst_51 {dimension_numbers = #tpu.dot_dimension_numbers<[1], [0], [0], [1], [0, 0, 1, 1], [], []>} : vector<16x20xf32>, vector<20x80xf32>, vector<16x80xf32> -> vector<16x80xf32>
    %158 = arith.addf %156, %157 : vector<16x80xf32>
    %159 = arith.negf %158 : vector<16x80xf32>
    %160 = math.exp %159 : vector<16x80xf32>
    %cst_52 = arith.constant 1.000000e+00 : f32
    %161 = vector.broadcast %cst_52 : f32 to vector<16x80xf32>
    %162 = arith.addf %161, %160 : vector<16x80xf32>
    %163 = arith.divf %161, %162 : vector<16x80xf32>
    %164 = vector.extract_strided_slice %163 {offsets = [0, 0], sizes = [16, 20], strides = [1, 1]} : vector<16x80xf32> to vector<16x20xf32>
    %165 = vector.extract_strided_slice %163 {offsets = [0, 20], sizes = [16, 20], strides = [1, 1]} : vector<16x80xf32> to vector<16x20xf32>
    %166 = vector.extract_strided_slice %163 {offsets = [0, 60], sizes = [16, 20], strides = [1, 1]} : vector<16x80xf32> to vector<16x20xf32>
    %167 = vector.extract_strided_slice %158 {offsets = [0, 40], sizes = [16, 20], strides = [1, 1]} : vector<16x80xf32> to vector<16x20xf32>
    %168 = math.tanh %167 : vector<16x20xf32>
    %169 = arith.mulf %165, %122 : vector<16x20xf32>
    %170 = arith.mulf %164, %168 : vector<16x20xf32>
    %171 = arith.addf %169, %170 : vector<16x20xf32>
    %172 = math.tanh %171 : vector<16x20xf32>
    %173 = arith.mulf %166, %172 : vector<16x20xf32>
    %174 = vector.broadcast %1 : vector<1x20xf32> to vector<16x20xf32>
    %175 = arith.subf %173, %174 : vector<16x20xf32>
    %c3_53 = arith.constant 3 : index
    %c0_54 = arith.constant 0 : index
    %c0_55 = arith.constant 0 : index
    %176 = vector.load %arg3[%c3_53, %c0_54, %c0_55] : memref<8x16x20xf32, #tpu.memory_space<vmem>>, vector<1x16x20xf32>
    %177 = vector.shape_cast %176 : vector<1x16x20xf32> to vector<16x20xf32>
    %178 = arith.mulf %175, %177 : vector<16x20xf32>
    %179 = vector.broadcast %1 : vector<1x20xf32> to vector<16x20xf32>
    %180 = arith.addf %178, %179 : vector<16x20xf32>
    %181 = arith.addf %180, %154 : vector<16x20xf32>
    %cst_56 = arith.constant dense<0.000000e+00> : vector<16xf32>
    %182 = vector.multi_reduction <add>, %181, %cst_56 [1] : vector<16x20xf32> to vector<16xf32>
    %183 = vector.shape_cast %182 : vector<16xf32> to vector<16x1xf32>
    %cst_57 = arith.constant 2.000000e+01 : f32
    %184 = vector.broadcast %cst_57 : f32 to vector<16x1xf32>
    %185 = arith.divf %183, %184 : vector<16x1xf32>
    %186 = vector.broadcast %185 : vector<16x1xf32> to vector<16x20xf32>
    %187 = arith.subf %181, %186 : vector<16x20xf32>
    %188 = arith.mulf %187, %187 : vector<16x20xf32>
    %cst_58 = arith.constant dense<0.000000e+00> : vector<16xf32>
    %189 = vector.multi_reduction <add>, %188, %cst_58 [1] : vector<16x20xf32> to vector<16xf32>
    %190 = vector.shape_cast %189 : vector<16xf32> to vector<16x1xf32>
    %cst_59 = arith.constant 2.000000e+01 : f32
    %191 = vector.broadcast %cst_59 : f32 to vector<16x1xf32>
    %192 = arith.divf %190, %191 : vector<16x1xf32>
    %193 = vector.broadcast %185 : vector<16x1xf32> to vector<16x20xf32>
    %194 = arith.subf %181, %193 : vector<16x20xf32>
    %cst_60 = arith.constant 9.99999974E-6 : f32
    %195 = vector.broadcast %cst_60 : f32 to vector<16x1xf32>
    %196 = arith.addf %192, %195 : vector<16x1xf32>
    %197 = math.rsqrt %196 : vector<16x1xf32>
    %198 = vector.broadcast %197 : vector<16x1xf32> to vector<16x20xf32>
    %199 = arith.mulf %194, %198 : vector<16x20xf32>
    %200 = vector.broadcast %2 : vector<1x20xf32> to vector<16x20xf32>
    %201 = arith.mulf %199, %200 : vector<16x20xf32>
    %202 = vector.broadcast %3 : vector<1x20xf32> to vector<16x20xf32>
    %203 = arith.addf %201, %202 : vector<16x20xf32>
    %c4 = arith.constant 4 : index
    %c0_61 = arith.constant 0 : index
    %c0_62 = arith.constant 0 : index
    %204 = vector.load %arg1[%c4, %c0_61, %c0_62] : memref<8x16x80xf32, #tpu.memory_space<vmem>>, vector<1x16x80xf32>
    %205 = vector.shape_cast %204 : vector<1x16x80xf32> to vector<16x80xf32>
    %cst_63 = arith.constant dense<0.000000e+00> : vector<16x80xf32>
    %206 = tpu.matmul %203, %0, %cst_63 {dimension_numbers = #tpu.dot_dimension_numbers<[1], [0], [0], [1], [0, 0, 1, 1], [], []>} : vector<16x20xf32>, vector<20x80xf32>, vector<16x80xf32> -> vector<16x80xf32>
    %207 = arith.addf %205, %206 : vector<16x80xf32>
    %208 = arith.negf %207 : vector<16x80xf32>
    %209 = math.exp %208 : vector<16x80xf32>
    %cst_64 = arith.constant 1.000000e+00 : f32
    %210 = vector.broadcast %cst_64 : f32 to vector<16x80xf32>
    %211 = arith.addf %210, %209 : vector<16x80xf32>
    %212 = arith.divf %210, %211 : vector<16x80xf32>
    %213 = vector.extract_strided_slice %212 {offsets = [0, 0], sizes = [16, 20], strides = [1, 1]} : vector<16x80xf32> to vector<16x20xf32>
    %214 = vector.extract_strided_slice %212 {offsets = [0, 20], sizes = [16, 20], strides = [1, 1]} : vector<16x80xf32> to vector<16x20xf32>
    %215 = vector.extract_strided_slice %212 {offsets = [0, 60], sizes = [16, 20], strides = [1, 1]} : vector<16x80xf32> to vector<16x20xf32>
    %216 = vector.extract_strided_slice %207 {offsets = [0, 40], sizes = [16, 20], strides = [1, 1]} : vector<16x80xf32> to vector<16x20xf32>
    %217 = math.tanh %216 : vector<16x20xf32>
    %218 = arith.mulf %214, %171 : vector<16x20xf32>
    %219 = arith.mulf %213, %217 : vector<16x20xf32>
    %220 = arith.addf %218, %219 : vector<16x20xf32>
    %221 = math.tanh %220 : vector<16x20xf32>
    %222 = arith.mulf %215, %221 : vector<16x20xf32>
    %223 = vector.broadcast %1 : vector<1x20xf32> to vector<16x20xf32>
    %224 = arith.subf %222, %223 : vector<16x20xf32>
    %c4_65 = arith.constant 4 : index
    %c0_66 = arith.constant 0 : index
    %c0_67 = arith.constant 0 : index
    %225 = vector.load %arg3[%c4_65, %c0_66, %c0_67] : memref<8x16x20xf32, #tpu.memory_space<vmem>>, vector<1x16x20xf32>
    %226 = vector.shape_cast %225 : vector<1x16x20xf32> to vector<16x20xf32>
    %227 = arith.mulf %224, %226 : vector<16x20xf32>
    %228 = vector.broadcast %1 : vector<1x20xf32> to vector<16x20xf32>
    %229 = arith.addf %227, %228 : vector<16x20xf32>
    %230 = arith.addf %229, %203 : vector<16x20xf32>
    %cst_68 = arith.constant dense<0.000000e+00> : vector<16xf32>
    %231 = vector.multi_reduction <add>, %230, %cst_68 [1] : vector<16x20xf32> to vector<16xf32>
    %232 = vector.shape_cast %231 : vector<16xf32> to vector<16x1xf32>
    %cst_69 = arith.constant 2.000000e+01 : f32
    %233 = vector.broadcast %cst_69 : f32 to vector<16x1xf32>
    %234 = arith.divf %232, %233 : vector<16x1xf32>
    %235 = vector.broadcast %234 : vector<16x1xf32> to vector<16x20xf32>
    %236 = arith.subf %230, %235 : vector<16x20xf32>
    %237 = arith.mulf %236, %236 : vector<16x20xf32>
    %cst_70 = arith.constant dense<0.000000e+00> : vector<16xf32>
    %238 = vector.multi_reduction <add>, %237, %cst_70 [1] : vector<16x20xf32> to vector<16xf32>
    %239 = vector.shape_cast %238 : vector<16xf32> to vector<16x1xf32>
    %cst_71 = arith.constant 2.000000e+01 : f32
    %240 = vector.broadcast %cst_71 : f32 to vector<16x1xf32>
    %241 = arith.divf %239, %240 : vector<16x1xf32>
    %242 = vector.broadcast %234 : vector<16x1xf32> to vector<16x20xf32>
    %243 = arith.subf %230, %242 : vector<16x20xf32>
    %cst_72 = arith.constant 9.99999974E-6 : f32
    %244 = vector.broadcast %cst_72 : f32 to vector<16x1xf32>
    %245 = arith.addf %241, %244 : vector<16x1xf32>
    %246 = math.rsqrt %245 : vector<16x1xf32>
    %247 = vector.broadcast %246 : vector<16x1xf32> to vector<16x20xf32>
    %248 = arith.mulf %243, %247 : vector<16x20xf32>
    %249 = vector.broadcast %2 : vector<1x20xf32> to vector<16x20xf32>
    %250 = arith.mulf %248, %249 : vector<16x20xf32>
    %251 = vector.broadcast %3 : vector<1x20xf32> to vector<16x20xf32>
    %252 = arith.addf %250, %251 : vector<16x20xf32>
    %c5 = arith.constant 5 : index
    %c0_73 = arith.constant 0 : index
    %c0_74 = arith.constant 0 : index
    %253 = vector.load %arg1[%c5, %c0_73, %c0_74] : memref<8x16x80xf32, #tpu.memory_space<vmem>>, vector<1x16x80xf32>
    %254 = vector.shape_cast %253 : vector<1x16x80xf32> to vector<16x80xf32>
    %cst_75 = arith.constant dense<0.000000e+00> : vector<16x80xf32>
    %255 = tpu.matmul %252, %0, %cst_75 {dimension_numbers = #tpu.dot_dimension_numbers<[1], [0], [0], [1], [0, 0, 1, 1], [], []>} : vector<16x20xf32>, vector<20x80xf32>, vector<16x80xf32> -> vector<16x80xf32>
    %256 = arith.addf %254, %255 : vector<16x80xf32>
    %257 = arith.negf %256 : vector<16x80xf32>
    %258 = math.exp %257 : vector<16x80xf32>
    %cst_76 = arith.constant 1.000000e+00 : f32
    %259 = vector.broadcast %cst_76 : f32 to vector<16x80xf32>
    %260 = arith.addf %259, %258 : vector<16x80xf32>
    %261 = arith.divf %259, %260 : vector<16x80xf32>
    %262 = vector.extract_strided_slice %261 {offsets = [0, 0], sizes = [16, 20], strides = [1, 1]} : vector<16x80xf32> to vector<16x20xf32>
    %263 = vector.extract_strided_slice %261 {offsets = [0, 20], sizes = [16, 20], strides = [1, 1]} : vector<16x80xf32> to vector<16x20xf32>
    %264 = vector.extract_strided_slice %261 {offsets = [0, 60], sizes = [16, 20], strides = [1, 1]} : vector<16x80xf32> to vector<16x20xf32>
    %265 = vector.extract_strided_slice %256 {offsets = [0, 40], sizes = [16, 20], strides = [1, 1]} : vector<16x80xf32> to vector<16x20xf32>
    %266 = math.tanh %265 : vector<16x20xf32>
    %267 = arith.mulf %263, %220 : vector<16x20xf32>
    %268 = arith.mulf %262, %266 : vector<16x20xf32>
    %269 = arith.addf %267, %268 : vector<16x20xf32>
    %270 = math.tanh %269 : vector<16x20xf32>
    %271 = arith.mulf %264, %270 : vector<16x20xf32>
    %272 = vector.broadcast %1 : vector<1x20xf32> to vector<16x20xf32>
    %273 = arith.subf %271, %272 : vector<16x20xf32>
    %c5_77 = arith.constant 5 : index
    %c0_78 = arith.constant 0 : index
    %c0_79 = arith.constant 0 : index
    %274 = vector.load %arg3[%c5_77, %c0_78, %c0_79] : memref<8x16x20xf32, #tpu.memory_space<vmem>>, vector<1x16x20xf32>
    %275 = vector.shape_cast %274 : vector<1x16x20xf32> to vector<16x20xf32>
    %276 = arith.mulf %273, %275 : vector<16x20xf32>
    %277 = vector.broadcast %1 : vector<1x20xf32> to vector<16x20xf32>
    %278 = arith.addf %276, %277 : vector<16x20xf32>
    %279 = arith.addf %278, %252 : vector<16x20xf32>
    %cst_80 = arith.constant dense<0.000000e+00> : vector<16xf32>
    %280 = vector.multi_reduction <add>, %279, %cst_80 [1] : vector<16x20xf32> to vector<16xf32>
    %281 = vector.shape_cast %280 : vector<16xf32> to vector<16x1xf32>
    %cst_81 = arith.constant 2.000000e+01 : f32
    %282 = vector.broadcast %cst_81 : f32 to vector<16x1xf32>
    %283 = arith.divf %281, %282 : vector<16x1xf32>
    %284 = vector.broadcast %283 : vector<16x1xf32> to vector<16x20xf32>
    %285 = arith.subf %279, %284 : vector<16x20xf32>
    %286 = arith.mulf %285, %285 : vector<16x20xf32>
    %cst_82 = arith.constant dense<0.000000e+00> : vector<16xf32>
    %287 = vector.multi_reduction <add>, %286, %cst_82 [1] : vector<16x20xf32> to vector<16xf32>
    %288 = vector.shape_cast %287 : vector<16xf32> to vector<16x1xf32>
    %cst_83 = arith.constant 2.000000e+01 : f32
    %289 = vector.broadcast %cst_83 : f32 to vector<16x1xf32>
    %290 = arith.divf %288, %289 : vector<16x1xf32>
    %291 = vector.broadcast %283 : vector<16x1xf32> to vector<16x20xf32>
    %292 = arith.subf %279, %291 : vector<16x20xf32>
    %cst_84 = arith.constant 9.99999974E-6 : f32
    %293 = vector.broadcast %cst_84 : f32 to vector<16x1xf32>
    %294 = arith.addf %290, %293 : vector<16x1xf32>
    %295 = math.rsqrt %294 : vector<16x1xf32>
    %296 = vector.broadcast %295 : vector<16x1xf32> to vector<16x20xf32>
    %297 = arith.mulf %292, %296 : vector<16x20xf32>
    %298 = vector.broadcast %2 : vector<1x20xf32> to vector<16x20xf32>
    %299 = arith.mulf %297, %298 : vector<16x20xf32>
    %300 = vector.broadcast %3 : vector<1x20xf32> to vector<16x20xf32>
    %301 = arith.addf %299, %300 : vector<16x20xf32>
    %c6 = arith.constant 6 : index
    %c0_85 = arith.constant 0 : index
    %c0_86 = arith.constant 0 : index
    %302 = vector.load %arg1[%c6, %c0_85, %c0_86] : memref<8x16x80xf32, #tpu.memory_space<vmem>>, vector<1x16x80xf32>
    %303 = vector.shape_cast %302 : vector<1x16x80xf32> to vector<16x80xf32>
    %cst_87 = arith.constant dense<0.000000e+00> : vector<16x80xf32>
    %304 = tpu.matmul %301, %0, %cst_87 {dimension_numbers = #tpu.dot_dimension_numbers<[1], [0], [0], [1], [0, 0, 1, 1], [], []>} : vector<16x20xf32>, vector<20x80xf32>, vector<16x80xf32> -> vector<16x80xf32>
    %305 = arith.addf %303, %304 : vector<16x80xf32>
    %306 = arith.negf %305 : vector<16x80xf32>
    %307 = math.exp %306 : vector<16x80xf32>
    %cst_88 = arith.constant 1.000000e+00 : f32
    %308 = vector.broadcast %cst_88 : f32 to vector<16x80xf32>
    %309 = arith.addf %308, %307 : vector<16x80xf32>
    %310 = arith.divf %308, %309 : vector<16x80xf32>
    %311 = vector.extract_strided_slice %310 {offsets = [0, 0], sizes = [16, 20], strides = [1, 1]} : vector<16x80xf32> to vector<16x20xf32>
    %312 = vector.extract_strided_slice %310 {offsets = [0, 20], sizes = [16, 20], strides = [1, 1]} : vector<16x80xf32> to vector<16x20xf32>
    %313 = vector.extract_strided_slice %310 {offsets = [0, 60], sizes = [16, 20], strides = [1, 1]} : vector<16x80xf32> to vector<16x20xf32>
    %314 = vector.extract_strided_slice %305 {offsets = [0, 40], sizes = [16, 20], strides = [1, 1]} : vector<16x80xf32> to vector<16x20xf32>
    %315 = math.tanh %314 : vector<16x20xf32>
    %316 = arith.mulf %312, %269 : vector<16x20xf32>
    %317 = arith.mulf %311, %315 : vector<16x20xf32>
    %318 = arith.addf %316, %317 : vector<16x20xf32>
    %319 = math.tanh %318 : vector<16x20xf32>
    %320 = arith.mulf %313, %319 : vector<16x20xf32>
    %321 = vector.broadcast %1 : vector<1x20xf32> to vector<16x20xf32>
    %322 = arith.subf %320, %321 : vector<16x20xf32>
    %c6_89 = arith.constant 6 : index
    %c0_90 = arith.constant 0 : index
    %c0_91 = arith.constant 0 : index
    %323 = vector.load %arg3[%c6_89, %c0_90, %c0_91] : memref<8x16x20xf32, #tpu.memory_space<vmem>>, vector<1x16x20xf32>
    %324 = vector.shape_cast %323 : vector<1x16x20xf32> to vector<16x20xf32>
    %325 = arith.mulf %322, %324 : vector<16x20xf32>
    %326 = vector.broadcast %1 : vector<1x20xf32> to vector<16x20xf32>
    %327 = arith.addf %325, %326 : vector<16x20xf32>
    %328 = arith.addf %327, %301 : vector<16x20xf32>
    %cst_92 = arith.constant dense<0.000000e+00> : vector<16xf32>
    %329 = vector.multi_reduction <add>, %328, %cst_92 [1] : vector<16x20xf32> to vector<16xf32>
    %330 = vector.shape_cast %329 : vector<16xf32> to vector<16x1xf32>
    %cst_93 = arith.constant 2.000000e+01 : f32
    %331 = vector.broadcast %cst_93 : f32 to vector<16x1xf32>
    %332 = arith.divf %330, %331 : vector<16x1xf32>
    %333 = vector.broadcast %332 : vector<16x1xf32> to vector<16x20xf32>
    %334 = arith.subf %328, %333 : vector<16x20xf32>
    %335 = arith.mulf %334, %334 : vector<16x20xf32>
    %cst_94 = arith.constant dense<0.000000e+00> : vector<16xf32>
    %336 = vector.multi_reduction <add>, %335, %cst_94 [1] : vector<16x20xf32> to vector<16xf32>
    %337 = vector.shape_cast %336 : vector<16xf32> to vector<16x1xf32>
    %cst_95 = arith.constant 2.000000e+01 : f32
    %338 = vector.broadcast %cst_95 : f32 to vector<16x1xf32>
    %339 = arith.divf %337, %338 : vector<16x1xf32>
    %340 = vector.broadcast %332 : vector<16x1xf32> to vector<16x20xf32>
    %341 = arith.subf %328, %340 : vector<16x20xf32>
    %cst_96 = arith.constant 9.99999974E-6 : f32
    %342 = vector.broadcast %cst_96 : f32 to vector<16x1xf32>
    %343 = arith.addf %339, %342 : vector<16x1xf32>
    %344 = math.rsqrt %343 : vector<16x1xf32>
    %345 = vector.broadcast %344 : vector<16x1xf32> to vector<16x20xf32>
    %346 = arith.mulf %341, %345 : vector<16x20xf32>
    %347 = vector.broadcast %2 : vector<1x20xf32> to vector<16x20xf32>
    %348 = arith.mulf %346, %347 : vector<16x20xf32>
    %349 = vector.broadcast %3 : vector<1x20xf32> to vector<16x20xf32>
    %350 = arith.addf %348, %349 : vector<16x20xf32>
    %c7 = arith.constant 7 : index
    %c0_97 = arith.constant 0 : index
    %c0_98 = arith.constant 0 : index
    %351 = vector.load %arg1[%c7, %c0_97, %c0_98] : memref<8x16x80xf32, #tpu.memory_space<vmem>>, vector<1x16x80xf32>
    %352 = vector.shape_cast %351 : vector<1x16x80xf32> to vector<16x80xf32>
    %cst_99 = arith.constant dense<0.000000e+00> : vector<16x80xf32>
    %353 = tpu.matmul %350, %0, %cst_99 {dimension_numbers = #tpu.dot_dimension_numbers<[1], [0], [0], [1], [0, 0, 1, 1], [], []>} : vector<16x20xf32>, vector<20x80xf32>, vector<16x80xf32> -> vector<16x80xf32>
    %354 = arith.addf %352, %353 : vector<16x80xf32>
    %355 = arith.negf %354 : vector<16x80xf32>
    %356 = math.exp %355 : vector<16x80xf32>
    %cst_100 = arith.constant 1.000000e+00 : f32
    %357 = vector.broadcast %cst_100 : f32 to vector<16x80xf32>
    %358 = arith.addf %357, %356 : vector<16x80xf32>
    %359 = arith.divf %357, %358 : vector<16x80xf32>
    %360 = vector.extract_strided_slice %359 {offsets = [0, 0], sizes = [16, 20], strides = [1, 1]} : vector<16x80xf32> to vector<16x20xf32>
    %361 = vector.extract_strided_slice %359 {offsets = [0, 20], sizes = [16, 20], strides = [1, 1]} : vector<16x80xf32> to vector<16x20xf32>
    %362 = vector.extract_strided_slice %359 {offsets = [0, 60], sizes = [16, 20], strides = [1, 1]} : vector<16x80xf32> to vector<16x20xf32>
    %363 = vector.extract_strided_slice %354 {offsets = [0, 40], sizes = [16, 20], strides = [1, 1]} : vector<16x80xf32> to vector<16x20xf32>
    %364 = math.tanh %363 : vector<16x20xf32>
    %365 = arith.mulf %361, %318 : vector<16x20xf32>
    %366 = arith.mulf %360, %364 : vector<16x20xf32>
    %367 = arith.addf %365, %366 : vector<16x20xf32>
    %368 = math.tanh %367 : vector<16x20xf32>
    %369 = arith.mulf %362, %368 : vector<16x20xf32>
    %370 = vector.broadcast %1 : vector<1x20xf32> to vector<16x20xf32>
    %371 = arith.subf %369, %370 : vector<16x20xf32>
    %c7_101 = arith.constant 7 : index
    %c0_102 = arith.constant 0 : index
    %c0_103 = arith.constant 0 : index
    %372 = vector.load %arg3[%c7_101, %c0_102, %c0_103] : memref<8x16x20xf32, #tpu.memory_space<vmem>>, vector<1x16x20xf32>
    %373 = vector.shape_cast %372 : vector<1x16x20xf32> to vector<16x20xf32>
    %374 = arith.mulf %371, %373 : vector<16x20xf32>
    %375 = vector.broadcast %1 : vector<1x20xf32> to vector<16x20xf32>
    %376 = arith.addf %374, %375 : vector<16x20xf32>
    %377 = arith.addf %376, %350 : vector<16x20xf32>
    %cst_104 = arith.constant dense<0.000000e+00> : vector<16xf32>
    %378 = vector.multi_reduction <add>, %377, %cst_104 [1] : vector<16x20xf32> to vector<16xf32>
    %379 = vector.shape_cast %378 : vector<16xf32> to vector<16x1xf32>
    %cst_105 = arith.constant 2.000000e+01 : f32
    %380 = vector.broadcast %cst_105 : f32 to vector<16x1xf32>
    %381 = arith.divf %379, %380 : vector<16x1xf32>
    %382 = vector.broadcast %381 : vector<16x1xf32> to vector<16x20xf32>
    %383 = arith.subf %377, %382 : vector<16x20xf32>
    %384 = arith.mulf %383, %383 : vector<16x20xf32>
    %cst_106 = arith.constant dense<0.000000e+00> : vector<16xf32>
    %385 = vector.multi_reduction <add>, %384, %cst_106 [1] : vector<16x20xf32> to vector<16xf32>
    %386 = vector.shape_cast %385 : vector<16xf32> to vector<16x1xf32>
    %cst_107 = arith.constant 2.000000e+01 : f32
    %387 = vector.broadcast %cst_107 : f32 to vector<16x1xf32>
    %388 = arith.divf %386, %387 : vector<16x1xf32>
    %389 = vector.broadcast %381 : vector<16x1xf32> to vector<16x20xf32>
    %390 = arith.subf %377, %389 : vector<16x20xf32>
    %cst_108 = arith.constant 9.99999974E-6 : f32
    %391 = vector.broadcast %cst_108 : f32 to vector<16x1xf32>
    %392 = arith.addf %388, %391 : vector<16x1xf32>
    %393 = math.rsqrt %392 : vector<16x1xf32>
    %394 = vector.broadcast %393 : vector<16x1xf32> to vector<16x20xf32>
    %395 = arith.mulf %390, %394 : vector<16x20xf32>
    %396 = vector.broadcast %2 : vector<1x20xf32> to vector<16x20xf32>
    %397 = arith.mulf %395, %396 : vector<16x20xf32>
    %398 = vector.broadcast %3 : vector<1x20xf32> to vector<16x20xf32>
    %399 = arith.addf %397, %398 : vector<16x20xf32>
    %400 = vector.shape_cast %56 : vector<16x20xf32> to vector<1x16x20xf32>
    %401 = vector.shape_cast %105 : vector<16x20xf32> to vector<1x16x20xf32>
    %402 = vector.shape_cast %154 : vector<16x20xf32> to vector<1x16x20xf32>
    %403 = vector.shape_cast %203 : vector<16x20xf32> to vector<1x16x20xf32>
    %404 = vector.shape_cast %252 : vector<16x20xf32> to vector<1x16x20xf32>
    %405 = vector.shape_cast %301 : vector<16x20xf32> to vector<1x16x20xf32>
    %406 = vector.shape_cast %350 : vector<16x20xf32> to vector<1x16x20xf32>
    %407 = vector.shape_cast %399 : vector<16x20xf32> to vector<1x16x20xf32>
    %408 = tpu.concatenate %400, %401, %402, %403, %404, %405, %406, %407 in 0 : vector<1x16x20xf32>, vector<1x16x20xf32>, vector<1x16x20xf32>, vector<1x16x20xf32>, vector<1x16x20xf32>, vector<1x16x20xf32>, vector<1x16x20xf32>, vector<1x16x20xf32> -> vector<8x16x20xf32>
    %409 = vector.shape_cast %4 : vector<1x20xf32> to vector<1x1x20xf32>
    %410 = vector.broadcast %409 : vector<1x1x20xf32> to vector<8x16x20xf32>
    %411 = arith.mulf %408, %410 : vector<8x16x20xf32>
    %cst_109 = arith.constant dense<0.000000e+00> : vector<8x16xf32>
    %412 = vector.multi_reduction <add>, %411, %cst_109 [2] : vector<8x16x20xf32> to vector<8x16xf32>
    %413 = vector.broadcast %5 : vector<1x1xf32> to vector<8x16xf32>
    %414 = arith.addf %412, %413 : vector<8x16xf32>
    %c0_110 = arith.constant 0 : index
    %c0_111 = arith.constant 0 : index
    %415 = vector.load %arg9[%c0_110, %c0_111] : memref<8x16xf32, #tpu.memory_space<vmem>>, vector<8x16xf32>
    tpu.vector_store %arg9[%c0_110, %c0_111], %414 {strides = array<i32>} : memref<8x16xf32, #tpu.memory_space<vmem>>, vector<8x16xf32>,
    %c0_112 = arith.constant 0 : index
    %c0_113 = arith.constant 0 : index
    %416 = vector.load %arg10[%c0_112, %c0_113] : memref<16x20xf32, #tpu.memory_space<vmem>>, vector<16x20xf32>
    tpu.vector_store %arg10[%c0_112, %c0_113], %399 {strides = array<i32>} : memref<16x20xf32, #tpu.memory_space<vmem>>, vector<16x20xf32>,
    %c0_114 = arith.constant 0 : index
    %c0_115 = arith.constant 0 : index
    %417 = vector.load %arg11[%c0_114, %c0_115] : memref<16x20xf32, #tpu.memory_space<vmem>>, vector<16x20xf32>
    tpu.vector_store %arg11[%c0_114, %c0_115], %367 {strides = array<i32>} : memref<16x20xf32, #tpu.memory_space<vmem>>, vector<16x20xf32>,
    return
  }
  func.func @transform_0(%arg0: i32) -> (i32, i32, i32) {
    %c0_i32 = arith.constant 0 : i32
    %c0_i32_0 = arith.constant 0 : i32
    %c0_i32_1 = arith.constant 0 : i32
    %c0_i32_2 = arith.constant 0 : i32
    return %c0_i32, %c0_i32_0, %c0_i32_1 : i32, i32, i32
  }
  func.func @transform_1(%arg0: i32) -> (i32, i32) {
    %c0_i32 = arith.constant 0 : i32
    %c0_i32_0 = arith.constant 0 : i32
    %c0_i32_1 = arith.constant 0 : i32
    return %c0_i32, %c0_i32_0 : i32, i32
  }
  func.func @transform_2(%arg0: i32) -> (i32, i32, i32) {
    %c0_i32 = arith.constant 0 : i32
    %c0_i32_0 = arith.constant 0 : i32
    %c0_i32_1 = arith.constant 0 : i32
    %c0_i32_2 = arith.constant 0 : i32
    return %c0_i32, %c0_i32_0, %c0_i32_1 : i32, i32, i32
  }
  func.func @transform_3(%arg0: i32) -> (i32, i32) {
    %c0_i32 = arith.constant 0 : i32
    %c0_i32_0 = arith.constant 0 : i32
    %c0_i32_1 = arith.constant 0 : i32
    return %c0_i32, %c0_i32_0 : i32, i32
  }
  func.func @transform_4(%arg0: i32) -> (i32, i32) {
    %c0_i32 = arith.constant 0 : i32
    %c0_i32_0 = arith.constant 0 : i32
    %c0_i32_1 = arith.constant 0 : i32
    return %c0_i32, %c0_i32_0 : i32, i32
  }
  func.func @transform_5(%arg0: i32) -> (i32, i32) {
    %c0_i32 = arith.constant 0 : i32
    %c0_i32_0 = arith.constant 0 : i32
    %c0_i32_1 = arith.constant 0 : i32
    return %c0_i32, %c0_i32_0 : i32, i32
  }
  func.func @transform_6(%arg0: i32) -> (i32, i32) {
    %c0_i32 = arith.constant 0 : i32
    %c0_i32_0 = arith.constant 0 : i32
    %c0_i32_1 = arith.constant 0 : i32
    return %c0_i32, %c0_i32_0 : i32, i32
  }
  func.func @transform_7(%arg0: i32) -> (i32, i32) {
    %c0_i32 = arith.constant 0 : i32
    %c0_i32_0 = arith.constant 0 : i32
    %c0_i32_1 = arith.constant 0 : i32
    return %c0_i32, %c0_i32_0 : i32, i32
  }
  func.func @transform_8(%arg0: i32) -> (i32, i32) {
    %c0_i32 = arith.constant 0 : i32
    %c0_i32_0 = arith.constant 0 : i32
    %c0_i32_1 = arith.constant 0 : i32
    return %c0_i32, %c0_i32_0 : i32, i32
  }
  func.func @transform_9(%arg0: i32) -> (i32, i32) {
    %c0_i32 = arith.constant 0 : i32
    %c0_i32_0 = arith.constant 0 : i32
    %c0_i32_1 = arith.constant 0 : i32
    return %c0_i32, %c0_i32_0 : i32, i32
  }
  func.func @transform_10(%arg0: i32) -> (i32, i32) {
    %c0_i32 = arith.constant 0 : i32
    %c0_i32_0 = arith.constant 0 : i32
    %c0_i32_1 = arith.constant 0 : i32
    return %c0_i32, %c0_i32_0 : i32, i32
  }
}

</mosaic_0001>

<llo_original>
// kernel: neuroflex_forward.1
$region0: #{neuroflex_forward.1}
  #allocation0 [shape = 'u32[]', space=smem, size = 0x4, offset = 0x4, fixed_abs, tag = 'smem constant byte address 0x4 - core index']
  #allocation1 [shape = 'u32[144,128]{1,0:T(1,128)}', space=vmem, size = 0x12000, scoped, tag = 'internal scratch']
  #allocation2 [shape = 'f32[1,1]{1,0:T(1,128)S(1)}', space=vmem, size = 0x200, scoped, tag = 'scoped memory for neuroflex_forward.1']
  %s0 = inlined_call_operand.vmem [shape: f32[8,16,80], index: 0, kind: input, shape index: {}]
  %s1 = inlined_call_operand.vmem [shape: f32[20,80], index: 1, kind: input, shape index: {}]
  %s2 = inlined_call_operand.vmem [shape: f32[8,16,20], index: 2, kind: input, shape index: {}]
  %s3 = inlined_call_operand.vmem [shape: f32[1,20], index: 3, kind: input, shape index: {}]
  %s4 = inlined_call_operand.vmem [shape: f32[1,20], index: 4, kind: input, shape index: {}]
  %s5 = inlined_call_operand.vmem [shape: f32[1,20], index: 5, kind: input, shape index: {}]
  %s6 = inlined_call_operand.vmem [shape: f32[1,20], index: 6, kind: input, shape index: {}]
  %s7 = inlined_call_operand.<no memory space> [shape: f32[1,1], index: 7, kind: input, shape index: {}]
  %s8 = inlined_call_operand.hbm [shape: f32[8,16], index: 8, kind: output, shape index: {0}]
  %s9 = inlined_call_operand.hbm [shape: f32[16,20], index: 9, kind: output, shape index: {1}]
  %s10 = inlined_call_operand.hbm [shape: f32[16,20], index: 10, kind: output, shape index: {2}]
  %11 = xla_tuple %s8, %s9, %s10
  %s12 = sld [smem:[#allocation0]]
  $region58: #{neuroflex_forward.1} parent=0
    _
  %s14 = ssub.s32 1, %s12
  %s15 = scalar_select 0, %s14, %s12
  %v16 = vstv %s7
  %17 = vst [vmem:[#allocation2] sm:$0x1] %v16
  $region1: #{neuroflex_forward.1} parent=0
    #allocation3 [shape = 'u8[4096]{0}', space=vmem, size = 0x1000, scoped, tag = 'output window, operand 0, single buffered']
    #allocation4 [shape = 's32[1]{0}', space=sflag, size = 0x4, scoped, tag = 'scoped memory for neuroflex_forward.1']
    #allocation5 [shape = 'u8[8192]{0}', space=vmem, size = 0x2000, scoped, tag = 'output window, operand 1, single buffered']
    #allocation6 [shape = 's32[1]{0}', space=sflag, size = 0x4, scoped, tag = 'scoped memory for neuroflex_forward.1']
    #allocation7 [shape = 'u8[8192]{0}', space=vmem, size = 0x2000, scoped, tag = 'output window, operand 2, single buffered']
    %18 = vsyncpa [#allocation4], 0
    %19 = vsyncpa [#allocation6], 0
    // Predicated region
    $region2: #{neuroflex_forward.1} parent=1 // pred_check
      _
    $region3: #{neuroflex_forward.1} parent=1 // pred_check_branch
      %21 = sbr.rel (0) target = $region5
    $region4: #{neuroflex_forward.1} parent=1 // pred_region
      _
    $region5: #{neuroflex_forward.1} parent=1 // pred_fallthru
      _
    // Predicated region
    $region6: #{neuroflex_forward.1} parent=1 // pred_check
      _
    $region7: #{neuroflex_forward.1} parent=1 // pred_check_branch
      %23 = sbr.rel (0) target = $region9
    $region8: #{neuroflex_forward.1} parent=1 // pred_region
      _
    $region9: #{neuroflex_forward.1} parent=1 // pred_fallthru
      _
    // Predicated region
    $region10: #{neuroflex_forward.1} parent=1 // pred_check
      _
    $region11: #{neuroflex_forward.1} parent=1 // pred_check_branch
      %25 = sbr.rel (0) target = $region13
    $region12: #{neuroflex_forward.1} parent=1 // pred_region
      _
    $region13: #{neuroflex_forward.1} parent=1 // pred_fallthru
      _
    // Predicated region
    $region14: #{neuroflex_forward.1} parent=1 // pred_check
      _
    $region15: #{neuroflex_forward.1} parent=1 // pred_check_branch
      %27 = sbr.rel (0) target = $region17
    $region16: #{neuroflex_forward.1} parent=1 // pred_region
      _
    $region17: #{neuroflex_forward.1} parent=1 // pred_fallthru
      _
    // Predicated region
    $region18: #{neuroflex_forward.1} parent=1 // pred_check
      _
    $region19: #{neuroflex_forward.1} parent=1 // pred_check_branch
      %29 = sbr.rel (0) target = $region21
    $region20: #{neuroflex_forward.1} parent=1 // pred_region
      _
    $region21: #{neuroflex_forward.1} parent=1 // pred_fallthru
      _
    // Predicated region
    $region22: #{neuroflex_forward.1} parent=1 // pred_check
      _
    $region23: #{neuroflex_forward.1} parent=1 // pred_check_branch
      %31 = sbr.rel (0) target = $region25
    $region24: #{neuroflex_forward.1} parent=1 // pred_region
      _
    $region25: #{neuroflex_forward.1} parent=1 // pred_fallthru
      _
    // Predicated region
    $region26: #{neuroflex_forward.1} parent=1 // pred_check
      _
    $region27: #{neuroflex_forward.1} parent=1 // pred_check_branch
      %33 = sbr.rel (0) target = $region29
    $region28: #{neuroflex_forward.1} parent=1 // pred_region
      _
    $region29: #{neuroflex_forward.1} parent=1 // pred_fallthru
      _
    // Predicated region
    $region30: #{neuroflex_forward.1} parent=1 // pred_check
      _
    $region31: #{neuroflex_forward.1} parent=1 // pred_check_branch
      %35 = sbr.rel (0) target = $region33
    $region32: #{neuroflex_forward.1} parent=1 // pred_region
      _
    $region33: #{neuroflex_forward.1} parent=1 // pred_fallthru
      _
    %v36 = vld [vmem:[%s1] sm:$0xff]
    %v37 = vld [vmem:[%s1 + $0x8] sm:$0xff]
    %v38 = vld [vmem:[%s1 + $0x10] sm:$0xf]
    %v39 = vld [vmem:[%s3] sm:$0x1]
    %v40 = vld [vmem:[%s4] sm:$0x1]
    %v41 = vld [vmem:[%s5] sm:$0x1]
    %v42 = vld [vmem:[%s6] sm:$0x1]
    %v43 = vld [vmem:[#allocation2] sm:$0x1]
    %v44 = vld [vmem:[%s0] sm:$0xff]
    %v45 = vld [vmem:[%s0 + $0x8] sm:$0xff]
    %vm46 = vcmask 162816
    %v48 = vsel %vm46, 0.0, 0
    %vm50 = vcmask 1043456
    %v52 = vsel %vm50, %v38, 0
    %54 = vmatprep.subr.mxu0 0.0
    %55 = vmatpush1.msra.mxu0 %v36
    %56 = vmatprep.subr.mxu0 0.0
    %57 = vmatpush1.msra.mxu0 %v37
    %58 = vmatprep.subr.mxu0 0.0
    %59 = vmatpush1.msra.mxu0 %v52
    %60 = vmatprep.subr.mxu0 0.0
    %61 = vmatpush1.msra.mxu0 0.0
    %62 = vmatprep.subr.mxu0 0.0
    %63 = vmatpush1.msra.mxu0 0.0
    %64 = vmatprep.subr.mxu0 0.0
    %65 = vmatpush1.msra.mxu0 0.0
    %66 = vmatprep.subr.mxu0 0.0
    %67 = vmatpush1.msra.mxu0 0.0
    %68 = vmatprep.subr.mxu0 0.0
    %69 = vmatpush1.msra.mxu0 0.0
    %70 = vmatprep.subr.mxu0 0.0
    %71 = vmatpush1.msra.mxu0 0.0
    %72 = vmatprep.subr.mxu0 0.0
    %73 = vmatpush1.msra.mxu0 0.0
    %74 = vmatprep.subr.mxu0 0.0
    %75 = vmatpush1.msra.mxu0 0.0
    %76 = vmatprep.subr.mxu0 0.0
    %77 = vmatpush1.msra.mxu0 0.0
    %78 = vmatprep.subr.mxu0 0.0
    %79 = vmatpush1.msra.mxu0 0.0
    %80 = vmatprep.subr.mxu0 0.0
    %81 = vmatpush1.msra.mxu0 0.0
    %82 = vmatprep.subr.mxu0 0.0
    %83 = vmatpush1.msra.mxu0 0.0
    %84 = vmatprep.subr.mxu0 0.0
    %85 = vmatpush1.msra.mxu0 0.0
    %86 = vmatprep.subr.mxu0 0.0
    %87 = vmatpush1.msra.mxu0 0.0
    %88 = vmatprep.subr.mxu0 0.0
    %89 = vmatpush1.msra.mxu0 0.0
    %90 = vmatprep.subr.mxu0 0.0
    %91 = vmatpush1.msra.mxu0 0.0
    %92 = vmatprep.subr.mxu0 0.0
    %93 = vmatpush1.msra.mxu0 0.0
    %94 = vmatprep.subr.mxu0 0.0
    %95 = vmatpush1.msra.mxu0 0.0
    %96 = vmatprep.subr.mxu0 0.0
    %97 = vmatpush1.msra.mxu0 0.0
    %98 = vmatprep.subr.mxu0 0.0
    %99 = vmatpush1.msra.mxu0 0.0
    %100 = vmatprep.subr.mxu0 0.0
    %101 = vmatpush1.msra.mxu0 0.0
    %102 = vmatprep.subr.mxu0 0.0
    %103 = vmatpush1.msra.mxu0 0.0
    %104 = vmatprep.subr.mxu0 0.0
    %105 = vmatpush1.msra.mxu0 0.0
    %106 = vmatprep.subr.mxu0 0.0
    %107 = vmatpush1.msra.mxu0 0.0
    %108 = vmatprep.subr.mxu0 0.0
    %109 = vmatpush1.msra.mxu0 0.0
    %110 = vmatprep.subr.mxu0 0.0
    %111 = vmatpush1.msra.mxu0 0.0
    %112 = vmatprep.subr.mxu0 0.0
    %113 = vmatpush1.msra.mxu0 0.0
    %114 = vmatprep.subr.mxu0 0.0
    %115 = vmatpush1.msra.mxu0 0.0
    %116 = vmatprep.subr.mxu0 0.0
    %117 = vmatpush1.msra.mxu0 0.0
    %118 = vmatprep.mubr.f32.mxu0 0.0
    %119 = vmatmul.mubr.f32.gmra.mrb[0].mxu0 %v48
    %v120 = vpop.f32.mrb[0].mxu0
    %v121 = vadd.f32 0.0, %v120
    %v122 = vpop.f32.mrb[0].mxu0
    %123 = vmatprep.mubr.f32.mxu0 0.0
    %124 = vmatmul.mubr.f32.gmra.mrb[0].mxu0 %v48
    %v125 = vpop.f32.mrb[0].mxu0
    %v126 = vadd.f32 0.0, %v125
    %v127 = vpop.f32.mrb[0].mxu0
    %128 = vdwg.mxu0
    %v129 = vadd.f32 %v44, %v121
    %v130 = vadd.f32 %v45, %v126
    %v131 = vxor.u32 %v129, 2147483648
    %v132 = vxor.u32 %v130, 2147483648
    %v133 = vmul.f32 %v131, 1.442695
    %v134 = vpow.pop %v133
    %v135 = vmul.f32 %v132, 1.442695
    %v136 = vpow.pop %v135
    %v137 = vadd.f32 %v134, 1.0
    %v138 = vadd.f32 %v136, 1.0
    %v139 = vrcp.pop %v137
    %v140 = vmul.f32 1.0, %v139
    %v141 = vrcp.pop %v138
    %v142 = vmul.f32 1.0, %v141
    %v143 = vtanh.pop %v129
    %v144 = vtanh.pop %v130
    %v145 = vmul.f32 %v140, 0.0
    %v146 = vmul.f32 %v142, 0.0
    %149 = vrot.lane.b32.xlu0 %v143, 88
    %v150 = vpop.permute.xlu0 %149
    %151 = vrot.lane.b32.xlu0 %v144, 88
    %v152 = vpop.permute.xlu0 %151
    %v155 = vmul.f32 %v140, %v150
    %v156 = vmul.f32 %v142, %v152
    %159 = vrot.lane.b32.xlu0 %v155, 20
    %v160 = vpop.permute.xlu0 %159
    %161 = vrot.lane.b32.xlu0 %v156, 20
    %v162 = vpop.permute.xlu0 %161
    %v165 = vadd.f32 %v145, %v160
    %v166 = vadd.f32 %v146, %v162
    %v167 = vtanh.pop %v165
    %v168 = vtanh.pop %v166
    %171 = vrot.lane.b32.xlu0 %v167, 40
    %v172 = vpop.permute.xlu0 %171
    %173 = vrot.lane.b32.xlu0 %v168, 40
    %v174 = vpop.permute.xlu0 %173
    %v177 = vmul.f32 %v140, %v172
    %v178 = vmul.f32 %v142, %v174
    %v180 = vlaneseq
    %v181 = vshrl.u32 %v180, 7
    %v182 = vsub.s32 0, %v181
    %v183 = vrot.slane %v39, %v182
    %184 = vrot.lane.b32.xlu0 %v183, 60
    %v185 = vpop.permute.xlu0 %184
    %v187 = vsub.f32 %v177, %v185
    %v188 = vsub.f32 %v178, %v185
    %v189 = vld [vmem:[%s2] sm:$0xff]
    %v190 = vld [vmem:[%s2 + $0x8] sm:$0xff]
    %193 = vrot.lane.b32.xlu0 %v189, 60
    %v194 = vpop.permute.xlu0 %193
    %195 = vrot.lane.b32.xlu0 %v190, 60
    %v196 = vpop.permute.xlu0 %195
    %v199 = vmul.f32 %v187, %v194
    %v200 = vmul.f32 %v188, %v196
    %v201 = vadd.f32 %v199, %v185
    %v202 = vadd.f32 %v200, %v185
    %v203 = vadd.f32 %v201, 0.0
    %v204 = vadd.f32 %v202, 0.0
    %207 = vrot.lane.b32.xlu0 %v203, 68
    %v208 = vpop.permute.xlu0 %207
    %209 = vrot.lane.b32.xlu0 %v204, 68
    %v210 = vpop.permute.xlu0 %209
    %v213 = vsel %vm46, %v208, 0.0
    %214 = vadd.xlane.f32.xlu0 %v213
    %v215 = vpop.xlane.xlu0 %214
    %v216 = vsel %vm46, %v210, 0.0
    %217 = vadd.xlane.f32.xlu0 %v216
    %v218 = vpop.xlane.xlu0 %217
    %v219 = vrcp.pop 20.0
    %v220 = vmul.f32 %v215, %v219
    %v221 = vmul.f32 %v218, %v219
    %v222 = vsub.f32 %v203, %v220
    %v223 = vsub.f32 %v204, %v221
    %v224 = vmul.f32 %v222, %v222
    %v225 = vmul.f32 %v223, %v223
    %228 = vrot.lane.b32.xlu0 %v224, 68
    %v229 = vpop.permute.xlu0 %228
    %230 = vrot.lane.b32.xlu0 %v225, 68
    %v231 = vpop.permute.xlu0 %230
    %v234 = vsel %vm46, %v229, 0.0
    %235 = vadd.xlane.f32.xlu0 %v234
    %v236 = vpop.xlane.xlu0 %235
    %v237 = vsel %vm46, %v231, 0.0
    %238 = vadd.xlane.f32.xlu0 %v237
    %v239 = vpop.xlane.xlu0 %238
    %v240 = vmul.f32 %v236, %v219
    %v241 = vmul.f32 %v239, %v219
    %v242 = vadd.f32 %v240, 1e-05
    %v243 = vadd.f32 %v241, 1e-05
    %v244 = vrsqrt.pop %v242
    %v245 = vrsqrt.pop %v243
    %v246 = vmul.f32 %v222, %v244
    %v247 = vmul.f32 %v223, %v245
    %v249 = vlaneseq
    %v250 = vshrl.u32 %v249, 7
    %v251 = vsub.s32 0, %v250
    %v252 = vrot.slane %v40, %v251
    %253 = vrot.lane.b32.xlu0 %v252, 60
    %v254 = vpop.permute.xlu0 %253
    %v256 = vmul.f32 %v246, %v254
    %v257 = vmul.f32 %v247, %v254
    %v259 = vlaneseq
    %v260 = vshrl.u32 %v259, 7
    %v261 = vsub.s32 0, %v260
    %v262 = vrot.slane %v41, %v261
    %263 = vrot.lane.b32.xlu0 %v262, 60
    %v264 = vpop.permute.xlu0 %263
    %v266 = vadd.f32 %v256, %v264
    %v267 = vadd.f32 %v257, %v264
    %s268 = scalar_lea.vmem %s0, 16
    %v269 = vld [vmem:[%s268] sm:$0xff]
    %v270 = vld [vmem:[%s268 + $0x8] sm:$0xff]
    %273 = vrot.lane.b32.xlu0 %v266, 68
    %v274 = vpop.permute.xlu0 %273
    %275 = vrot.lane.b32.xlu0 %v267, 68
    %v276 = vpop.permute.xlu0 %275
    %v277 = vsel %vm46, %v274, 0
    %v279 = vsel %vm46, %v276, 0
    %281 = vmatprep.subr.mxu0 0.0
    %282 = vmatpush1.msra.mxu0 %v36
    %283 = vmatprep.subr.mxu0 0.0
    %284 = vmatpush1.msra.mxu0 %v37
    %285 = vmatprep.subr.mxu0 0.0
    %286 = vmatpush1.msra.mxu0 %v52
    %287 = vmatprep.subr.mxu0 0.0
    %288 = vmatpush1.msra.mxu0 0.0
    %289 = vmatprep.subr.mxu0 0.0
    %290 = vmatpush1.msra.mxu0 0.0
    %291 = vmatprep.subr.mxu0 0.0
    %292 = vmatpush1.msra.mxu0 0.0
    %293 = vmatprep.subr.mxu0 0.0
    %294 = vmatpush1.msra.mxu0 0.0
    %295 = vmatprep.subr.mxu0 0.0
    %296 = vmatpush1.msra.mxu0 0.0
    %297 = vmatprep.subr.mxu0 0.0
    %298 = vmatpush1.msra.mxu0 0.0
    %299 = vmatprep.subr.mxu0 0.0
    %300 = vmatpush1.msra.mxu0 0.0
    %301 = vmatprep.subr.mxu0 0.0
    %302 = vmatpush1.msra.mxu0 0.0
    %303 = vmatprep.subr.mxu0 0.0
    %304 = vmatpush1.msra.mxu0 0.0
    %305 = vmatprep.subr.mxu0 0.0
    %306 = vmatpush1.msra.mxu0 0.0
    %307 = vmatprep.subr.mxu0 0.0
    %308 = vmatpush1.msra.mxu0 0.0
    %309 = vmatprep.subr.mxu0 0.0
    %310 = vmatpush1.msra.mxu0 0.0
    %311 = vmatprep.subr.mxu0 0.0
    %312 = vmatpush1.msra.mxu0 0.0
    %313 = vmatprep.subr.mxu0 0.0
    %314 = vmatpush1.msra.mxu0 0.0
    %315 = vmatprep.subr.mxu0 0.0
    %316 = vmatpush1.msra.mxu0 0.0
    %317 = vmatprep.subr.mxu0 0.0
    %318 = vmatpush1.msra.mxu0 0.0
    %319 = vmatprep.subr.mxu0 0.0
    %320 = vmatpush1.msra.mxu0 0.0
    %321 = vmatprep.subr.mxu0 0.0
    %322 = vmatpush1.msra.mxu0 0.0
    %323 = vmatprep.subr.mxu0 0.0
    %324 = vmatpush1.msra.mxu0 0.0
    %325 = vmatprep.subr.mxu0 0.0
    %326 = vmatpush1.msra.mxu0 0.0
    %327 = vmatprep.subr.mxu0 0.0
    %328 = vmatpush1.msra.mxu0 0.0
    %329 = vmatprep.subr.mxu0 0.0
    %330 = vmatpush1.msra.mxu0 0.0
    %331 = vmatprep.subr.mxu0 0.0
    %332 = vmatpush1.msra.mxu0 0.0
    %333 = vmatprep.subr.mxu0 0.0
    %334 = vmatpush1.msra.mxu0 0.0
    %335 = vmatprep.subr.mxu0 0.0
    %336 = vmatpush1.msra.mxu0 0.0
    %337 = vmatprep.subr.mxu0 0.0
    %338 = vmatpush1.msra.mxu0 0.0
    %339 = vmatprep.subr.mxu0 0.0
    %340 = vmatpush1.msra.mxu0 0.0
    %341 = vmatprep.subr.mxu0 0.0
    %342 = vmatpush1.msra.mxu0 0.0
    %343 = vmatprep.subr.mxu0 0.0
    %344 = vmatpush1.msra.mxu0 0.0
    %345 = vmatprep.mubr.f32.mxu0 0.0
    %346 = vmatmul.mubr.f32.gmra.mrb[0].mxu0 %v277
    %v347 = vpop.f32.mrb[0].mxu0
    %v348 = vadd.f32 0.0, %v347
    %v349 = vpop.f32.mrb[0].mxu0
    %350 = vmatprep.mubr.f32.mxu0 0.0
    %351 = vmatmul.mubr.f32.gmra.mrb[0].mxu0 %v279
    %v352 = vpop.f32.mrb[0].mxu0
    %v353 = vadd.f32 0.0, %v352
    %v354 = vpop.f32.mrb[0].mxu0
    %355 = vdwg.mxu0
    %v356 = vadd.f32 %v269, %v348
    %v357 = vadd.f32 %v270, %v353
    %v358 = vxor.u32 %v356, 2147483648
    %v359 = vxor.u32 %v357, 2147483648
    %v360 = vmul.f32 %v358, 1.442695
    %v361 = vpow.pop %v360
    %v362 = vmul.f32 %v359, 1.442695
    %v363 = vpow.pop %v362
    %v364 = vadd.f32 %v361, 1.0
    %v365 = vadd.f32 %v363, 1.0
    %v366 = vrcp.pop %v364
    %v367 = vmul.f32 1.0, %v366
    %v368 = vrcp.pop %v365
    %v369 = vmul.f32 1.0, %v368
    %v370 = vtanh.pop %v356
    %v371 = vtanh.pop %v357
    %v372 = vmul.f32 %v367, %v165
    %v373 = vmul.f32 %v369, %v166
    %376 = vrot.lane.b32.xlu0 %v370, 88
    %v377 = vpop.permute.xlu0 %376
    %378 = vrot.lane.b32.xlu0 %v371, 88
    %v379 = vpop.permute.xlu0 %378
    %v382 = vmul.f32 %v367, %v377
    %v383 = vmul.f32 %v369, %v379
    %386 = vrot.lane.b32.xlu0 %v382, 20
    %v387 = vpop.permute.xlu0 %386
    %388 = vrot.lane.b32.xlu0 %v383, 20
    %v389 = vpop.permute.xlu0 %388
    %v392 = vadd.f32 %v372, %v387
    %v393 = vadd.f32 %v373, %v389
    %v394 = vtanh.pop %v392
    %v395 = vtanh.pop %v393
    %398 = vrot.lane.b32.xlu0 %v394, 40
    %v399 = vpop.permute.xlu0 %398
    %400 = vrot.lane.b32.xlu0 %v395, 40
    %v401 = vpop.permute.xlu0 %400
    %v404 = vmul.f32 %v367, %v399
    %v405 = vmul.f32 %v369, %v401
    %v406 = vsub.f32 %v404, %v185
    %v407 = vsub.f32 %v405, %v185
    %s408 = scalar_lea.vmem %s2, 16
    %v409 = vld [vmem:[%s408] sm:$0xff]
    %v410 = vld [vmem:[%s408 + $0x8] sm:$0xff]
    %413 = vrot.lane.b32.xlu0 %v409, 60
    %v414 = vpop.permute.xlu0 %413
    %415 = vrot.lane.b32.xlu0 %v410, 60
    %v416 = vpop.permute.xlu0 %415
    %v419 = vmul.f32 %v406, %v414
    %v420 = vmul.f32 %v407, %v416
    %v421 = vadd.f32 %v419, %v185
    %v422 = vadd.f32 %v420, %v185
    %v423 = vadd.f32 %v421, %v266
    %v424 = vadd.f32 %v422, %v267
    %427 = vrot.lane.b32.xlu0 %v423, 68
    %v428 = vpop.permute.xlu0 %427
    %429 = vrot.lane.b32.xlu0 %v424, 68
    %v430 = vpop.permute.xlu0 %429
    %v433 = vsel %vm46, %v428, 0.0
    %434 = vadd.xlane.f32.xlu0 %v433
    %v435 = vpop.xlane.xlu0 %434
    %v436 = vsel %vm46, %v430, 0.0
    %437 = vadd.xlane.f32.xlu0 %v436
    %v438 = vpop.xlane.xlu0 %437
    %v439 = vmul.f32 %v435, %v219
    %v440 = vmul.f32 %v438, %v219
    %v441 = vsub.f32 %v423, %v439
    %v442 = vsub.f32 %v424, %v440
    %v443 = vmul.f32 %v441, %v441
    %v444 = vmul.f32 %v442, %v442
    %447 = vrot.lane.b32.xlu0 %v443, 68
    %v448 = vpop.permute.xlu0 %447
    %449 = vrot.lane.b32.xlu0 %v444, 68
    %v450 = vpop.permute.xlu0 %449
    %v453 = vsel %vm46, %v448, 0.0
    %454 = vadd.xlane.f32.xlu0 %v453
    %v455 = vpop.xlane.xlu0 %454
    %v456 = vsel %vm46, %v450, 0.0
    %457 = vadd.xlane.f32.xlu0 %v456
    %v458 = vpop.xlane.xlu0 %457
    %v459 = vmul.f32 %v455, %v219
    %v460 = vmul.f32 %v458, %v219
    %v461 = vadd.f32 %v459, 1e-05
    %v462 = vadd.f32 %v460, 1e-05
    %v463 = vrsqrt.pop %v461
    %v464 = vrsqrt.pop %v462
    %v465 = vmul.f32 %v441, %v463
    %v466 = vmul.f32 %v442, %v464
    %v467 = vmul.f32 %v465, %v254
    %v468 = vmul.f32 %v466, %v254
    %v469 = vadd.f32 %v467, %v264
    %v470 = vadd.f32 %v468, %v264
    %s471 = scalar_lea.vmem %s0, 32
    %v472 = vld [vmem:[%s471] sm:$0xff]
    %v473 = vld [vmem:[%s471 + $0x8] sm:$0xff]
    %476 = vrot.lane.b32.xlu0 %v469, 68
    %v477 = vpop.permute.xlu0 %476
    %478 = vrot.lane.b32.xlu0 %v470, 68
    %v479 = vpop.permute.xlu0 %478
    %v480 = vsel %vm46, %v477, 0
    %v482 = vsel %vm46, %v479, 0
    %484 = vmatprep.subr.mxu0 0.0
    %485 = vmatpush1.msra.mxu0 %v36
    %486 = vmatprep.subr.mxu0 0.0
    %487 = vmatpush1.msra.mxu0 %v37
    %488 = vmatprep.subr.mxu0 0.0
    %489 = vmatpush1.msra.mxu0 %v52
    %490 = vmatprep.subr.mxu0 0.0
    %491 = vmatpush1.msra.mxu0 0.0
    %492 = vmatprep.subr.mxu0 0.0
    %493 = vmatpush1.msra.mxu0 0.0
    %494 = vmatprep.subr.mxu0 0.0
    %495 = vmatpush1.msra.mxu0 0.0
    %496 = vmatprep.subr.mxu0 0.0
    %497 = vmatpush1.msra.mxu0 0.0
    %498 = vmatprep.subr.mxu0 0.0
    %499 = vmatpush1.msra.mxu0 0.0
    %500 = vmatprep.subr.mxu0 0.0
    %501 = vmatpush1.msra.mxu0 0.0
    %502 = vmatprep.subr.mxu0 0.0
    %503 = vmatpush1.msra.mxu0 0.0
    %504 = vmatprep.subr.mxu0 0.0
    %505 = vmatpush1.msra.mxu0 0.0
    %506 = vmatprep.subr.mxu0 0.0
    %507 = vmatpush1.msra.mxu0 0.0
    %508 = vmatprep.subr.mxu0 0.0
    %509 = vmatpush1.msra.mxu0 0.0
    %510 = vmatprep.subr.mxu0 0.0
    %511 = vmatpush1.msra.mxu0 0.0
    %512 = vmatprep.subr.mxu0 0.0
    %513 = vmatpush1.msra.mxu0 0.0
    %514 = vmatprep.subr.mxu0 0.0
    %515 = vmatpush1.msra.mxu0 0.0
    %516 = vmatprep.subr.mxu0 0.0
    %517 = vmatpush1.msra.mxu0 0.0
    %518 = vmatprep.subr.mxu0 0.0
    %519 = vmatpush1.msra.mxu0 0.0
    %520 = vmatprep.subr.mxu0 0.0
    %521 = vmatpush1.msra.mxu0 0.0
    %522 = vmatprep.subr.mxu0 0.0
    %523 = vmatpush1.msra.mxu0 0.0
    %524 = vmatprep.subr.mxu0 0.0
    %525 = vmatpush1.msra.mxu0 0.0
    %526 = vmatprep.subr.mxu0 0.0
    %527 = vmatpush1.msra.mxu0 0.0
    %528 = vmatprep.subr.mxu0 0.0
    %529 = vmatpush1.msra.mxu0 0.0
    %530 = vmatprep.subr.mxu0 0.0
    %531 = vmatpush1.msra.mxu0 0.0
    %532 = vmatprep.subr.mxu0 0.0
    %533 = vmatpush1.msra.mxu0 0.0
    %534 = vmatprep.subr.mxu0 0.0
    %535 = vmatpush1.msra.mxu0 0.0
    %536 = vmatprep.subr.mxu0 0.0
    %537 = vmatpush1.msra.mxu0 0.0
    %538 = vmatprep.subr.mxu0 0.0
    %539 = vmatpush1.msra.mxu0 0.0
    %540 = vmatprep.subr.mxu0 0.0
    %541 = vmatpush1.msra.mxu0 0.0
    %542 = vmatprep.subr.mxu0 0.0
    %543 = vmatpush1.msra.mxu0 0.0
    %544 = vmatprep.subr.mxu0 0.0
    %545 = vmatpush1.msra.mxu0 0.0
    %546 = vmatprep.subr.mxu0 0.0
    %547 = vmatpush1.msra.mxu0 0.0
    %548 = vmatprep.mubr.f32.mxu0 0.0
    %549 = vmatmul.mubr.f32.gmra.mrb[0].mxu0 %v480
    %v550 = vpop.f32.mrb[0].mxu0
    %v551 = vadd.f32 0.0, %v550
    %v552 = vpop.f32.mrb[0].mxu0
    %553 = vmatprep.mubr.f32.mxu0 0.0
    %554 = vmatmul.mubr.f32.gmra.mrb[0].mxu0 %v482
    %v555 = vpop.f32.mrb[0].mxu0
    %v556 = vadd.f32 0.0, %v555
    %v557 = vpop.f32.mrb[0].mxu0
    %558 = vdwg.mxu0
    %v559 = vadd.f32 %v472, %v551
    %v560 = vadd.f32 %v473, %v556
    %v561 = vxor.u32 %v559, 2147483648
    %v562 = vxor.u32 %v560, 2147483648
    %v563 = vmul.f32 %v561, 1.442695
    %v564 = vpow.pop %v563
    %v565 = vmul.f32 %v562, 1.442695
    %v566 = vpow.pop %v565
    %v567 = vadd.f32 %v564, 1.0
    %v568 = vadd.f32 %v566, 1.0
    %v569 = vrcp.pop %v567
    %v570 = vmul.f32 1.0, %v569
    %v571 = vrcp.pop %v568
    %v572 = vmul.f32 1.0, %v571
    %v573 = vtanh.pop %v559
    %v574 = vtanh.pop %v560
    %v575 = vmul.f32 %v570, %v392
    %v576 = vmul.f32 %v572, %v393
    %579 = vrot.lane.b32.xlu0 %v573, 88
    %v580 = vpop.permute.xlu0 %579
    %581 = vrot.lane.b32.xlu0 %v574, 88
    %v582 = vpop.permute.xlu0 %581
    %v585 = vmul.f32 %v570, %v580
    %v586 = vmul.f32 %v572, %v582
    %589 = vrot.lane.b32.xlu0 %v585, 20
    %v590 = vpop.permute.xlu0 %589
    %591 = vrot.lane.b32.xlu0 %v586, 20
    %v592 = vpop.permute.xlu0 %591
    %v595 = vadd.f32 %v575, %v590
    %v596 = vadd.f32 %v576, %v592
    %v597 = vtanh.pop %v595
    %v598 = vtanh.pop %v596
    %601 = vrot.lane.b32.xlu0 %v597, 40
    %v602 = vpop.permute.xlu0 %601
    %603 = vrot.lane.b32.xlu0 %v598, 40
    %v604 = vpop.permute.xlu0 %603
    %v607 = vmul.f32 %v570, %v602
    %v608 = vmul.f32 %v572, %v604
    %v609 = vsub.f32 %v607, %v185
    %v610 = vsub.f32 %v608, %v185
    %s611 = scalar_lea.vmem %s2, 32
    %v612 = vld [vmem:[%s611] sm:$0xff]
    %v613 = vld [vmem:[%s611 + $0x8] sm:$0xff]
    %616 = vrot.lane.b32.xlu0 %v612, 60
    %v617 = vpop.permute.xlu0 %616
    %618 = vrot.lane.b32.xlu0 %v613, 60
    %v619 = vpop.permute.xlu0 %618
    %v622 = vmul.f32 %v609, %v617
    %v623 = vmul.f32 %v610, %v619
    %v624 = vadd.f32 %v622, %v185
    %v625 = vadd.f32 %v623, %v185
    %v626 = vadd.f32 %v624, %v469
    %v627 = vadd.f32 %v625, %v470
    %630 = vrot.lane.b32.xlu0 %v626, 68
    %v631 = vpop.permute.xlu0 %630
    %632 = vrot.lane.b32.xlu0 %v627, 68
    %v633 = vpop.permute.xlu0 %632
    %v636 = vsel %vm46, %v631, 0.0
    %637 = vadd.xlane.f32.xlu0 %v636
    %v638 = vpop.xlane.xlu0 %637
    %v639 = vsel %vm46, %v633, 0.0
    %640 = vadd.xlane.f32.xlu0 %v639
    %v641 = vpop.xlane.xlu0 %640
    %v642 = vmul.f32 %v638, %v219
    %v643 = vmul.f32 %v641, %v219
    %v644 = vsub.f32 %v626, %v642
    %v645 = vsub.f32 %v627, %v643
    %v646 = vmul.f32 %v644, %v644
    %v647 = vmul.f32 %v645, %v645
    %650 = vrot.lane.b32.xlu0 %v646, 68
    %v651 = vpop.permute.xlu0 %650
    %652 = vrot.lane.b32.xlu0 %v647, 68
    %v653 = vpop.permute.xlu0 %652
    %v656 = vsel %vm46, %v651, 0.0
    %657 = vadd.xlane.f32.xlu0 %v656
    %v658 = vpop.xlane.xlu0 %657
    %v659 = vsel %vm46, %v653, 0.0
    %660 = vadd.xlane.f32.xlu0 %v659
    %v661 = vpop.xlane.xlu0 %660
    %v662 = vmul.f32 %v658, %v219
    %v663 = vmul.f32 %v661, %v219
    %v664 = vadd.f32 %v662, 1e-05
    %v665 = vadd.f32 %v663, 1e-05
    %v666 = vrsqrt.pop %v664
    %v667 = vrsqrt.pop %v665
    %v668 = vmul.f32 %v644, %v666
    %v669 = vmul.f32 %v645, %v667
    %v670 = vmul.f32 %v668, %v254
    %v671 = vmul.f32 %v669, %v254
    %v672 = vadd.f32 %v670, %v264
    %v673 = vadd.f32 %v671, %v264
    %s674 = scalar_lea.vmem %s0, 48
    %v675 = vld [vmem:[%s674] sm:$0xff]
    %v676 = vld [vmem:[%s674 + $0x8] sm:$0xff]
    %679 = vrot.lane.b32.xlu0 %v672, 68
    %v680 = vpop.permute.xlu0 %679
    %681 = vrot.lane.b32.xlu0 %v673, 68
    %v682 = vpop.permute.xlu0 %681
    %v683 = vsel %vm46, %v680, 0
    %v685 = vsel %vm46, %v682, 0
    %687 = vmatprep.subr.mxu0 0.0
    %688 = vmatpush1.msra.mxu0 %v36
    %689 = vmatprep.subr.mxu0 0.0
    %690 = vmatpush1.msra.mxu0 %v37
    %691 = vmatprep.subr.mxu0 0.0
    %692 = vmatpush1.msra.mxu0 %v52
    %693 = vmatprep.subr.mxu0 0.0
    %694 = vmatpush1.msra.mxu0 0.0
    %695 = vmatprep.subr.mxu0 0.0
    %696 = vmatpush1.msra.mxu0 0.0
    %697 = vmatprep.subr.mxu0 0.0
    %698 = vmatpush1.msra.mxu0 0.0
    %699 = vmatprep.subr.mxu0 0.0
    %700 = vmatpush1.msra.mxu0 0.0
    %701 = vmatprep.subr.mxu0 0.0
    %702 = vmatpush1.msra.mxu0 0.0
    %703 = vmatprep.subr.mxu0 0.0
    %704 = vmatpush1.msra.mxu0 0.0
    %705 = vmatprep.subr.mxu0 0.0
    %706 = vmatpush1.msra.mxu0 0.0
    %707 = vmatprep.subr.mxu0 0.0
    %708 = vmatpush1.msra.mxu0 0.0
    %709 = vmatprep.subr.mxu0 0.0
    %710 = vmatpush1.msra.mxu0 0.0
    %711 = vmatprep.subr.mxu0 0.0
    %712 = vmatpush1.msra.mxu0 0.0
    %713 = vmatprep.subr.mxu0 0.0
    %714 = vmatpush1.msra.mxu0 0.0
    %715 = vmatprep.subr.mxu0 0.0
    %716 = vmatpush1.msra.mxu0 0.0
    %717 = vmatprep.subr.mxu0 0.0
    %718 = vmatpush1.msra.mxu0 0.0
    %719 = vmatprep.subr.mxu0 0.0
    %720 = vmatpush1.msra.mxu0 0.0
    %721 = vmatprep.subr.mxu0 0.0
    %722 = vmatpush1.msra.mxu0 0.0
    %723 = vmatprep.subr.mxu0 0.0
    %724 = vmatpush1.msra.mxu0 0.0
    %725 = vmatprep.subr.mxu0 0.0
    %726 = vmatpush1.msra.mxu0 0.0
    %727 = vmatprep.subr.mxu0 0.0
    %728 = vmatpush1.msra.mxu0 0.0
    %729 = vmatprep.subr.mxu0 0.0
    %730 = vmatpush1.msra.mxu0 0.0
    %731 = vmatprep.subr.mxu0 0.0
    %732 = vmatpush1.msra.mxu0 0.0
    %733 = vmatprep.subr.mxu0 0.0
    %734 = vmatpush1.msra.mxu0 0.0
    %735 = vmatprep.subr.mxu0 0.0
    %736 = vmatpush1.msra.mxu0 0.0
    %737 = vmatprep.subr.mxu0 0.0
    %738 = vmatpush1.msra.mxu0 0.0
    %739 = vmatprep.subr.mxu0 0.0
    %740 = vmatpush1.msra.mxu0 0.0
    %741 = vmatprep.subr.mxu0 0.0
    %742 = vmatpush1.msra.mxu0 0.0
    %743 = vmatprep.subr.mxu0 0.0
    %744 = vmatpush1.msra.mxu0 0.0
    %745 = vmatprep.subr.mxu0 0.0
    %746 = vmatpush1.msra.mxu0 0.0
    %747 = vmatprep.subr.mxu0 0.0
    %748 = vmatpush1.msra.mxu0 0.0
    %749 = vmatprep.subr.mxu0 0.0
    %750 = vmatpush1.msra.mxu0 0.0
    %751 = vmatprep.mubr.f32.mxu0 0.0
    %752 = vmatmul.mubr.f32.gmra.mrb[0].mxu0 %v683
    %v753 = vpop.f32.mrb[0].mxu0
    %v754 = vadd.f32 0.0, %v753
    %v755 = vpop.f32.mrb[0].mxu0
    %756 = vmatprep.mubr.f32.mxu0 0.0
    %757 = vmatmul.mubr.f32.gmra.mrb[0].mxu0 %v685
    %v758 = vpop.f32.mrb[0].mxu0
    %v759 = vadd.f32 0.0, %v758
    %v760 = vpop.f32.mrb[0].mxu0
    %761 = vdwg.mxu0
    %v762 = vadd.f32 %v675, %v754
    %v763 = vadd.f32 %v676, %v759
    %v764 = vxor.u32 %v762, 2147483648
    %v765 = vxor.u32 %v763, 2147483648
    %v766 = vmul.f32 %v764, 1.442695
    %v767 = vpow.pop %v766
    %v768 = vmul.f32 %v765, 1.442695
    %v769 = vpow.pop %v768
    %v770 = vadd.f32 %v767, 1.0
    %v771 = vadd.f32 %v769, 1.0
    %v772 = vrcp.pop %v770
    %v773 = vmul.f32 1.0, %v772
    %v774 = vrcp.pop %v771
    %v775 = vmul.f32 1.0, %v774
    %v776 = vtanh.pop %v762
    %v777 = vtanh.pop %v763
    %v778 = vmul.f32 %v773, %v595
    %v779 = vmul.f32 %v775, %v596
    %782 = vrot.lane.b32.xlu0 %v776, 88
    %v783 = vpop.permute.xlu0 %782
    %784 = vrot.lane.b32.xlu0 %v777, 88
    %v785 = vpop.permute.xlu0 %784
    %v788 = vmul.f32 %v773, %v783
    %v789 = vmul.f32 %v775, %v785
    %792 = vrot.lane.b32.xlu0 %v788, 20
    %v793 = vpop.permute.xlu0 %792
    %794 = vrot.lane.b32.xlu0 %v789, 20
    %v795 = vpop.permute.xlu0 %794
    %v798 = vadd.f32 %v778, %v793
    %v799 = vadd.f32 %v779, %v795
    %v800 = vtanh.pop %v798
    %v801 = vtanh.pop %v799
    %804 = vrot.lane.b32.xlu0 %v800, 40
    %v805 = vpop.permute.xlu0 %804
    %806 = vrot.lane.b32.xlu0 %v801, 40
    %v807 = vpop.permute.xlu0 %806
    %v810 = vmul.f32 %v773, %v805
    %v811 = vmul.f32 %v775, %v807
    %v812 = vsub.f32 %v810, %v185
    %v813 = vsub.f32 %v811, %v185
    %s814 = scalar_lea.vmem %s2, 48
    %v815 = vld [vmem:[%s814] sm:$0xff]
    %v816 = vld [vmem:[%s814 + $0x8] sm:$0xff]
    %819 = vrot.lane.b32.xlu0 %v815, 60
    %v820 = vpop.permute.xlu0 %819
    %821 = vrot.lane.b32.xlu0 %v816, 60
    %v822 = vpop.permute.xlu0 %821
    %v825 = vmul.f32 %v812, %v820
    %v826 = vmul.f32 %v813, %v822
    %v827 = vadd.f32 %v825, %v185
    %v828 = vadd.f32 %v826, %v185
    %v829 = vadd.f32 %v827, %v672
    %v830 = vadd.f32 %v828, %v673
    %833 = vrot.lane.b32.xlu0 %v829, 68
    %v834 = vpop.permute.xlu0 %833
    %835 = vrot.lane.b32.xlu0 %v830, 68
    %v836 = vpop.permute.xlu0 %835
    %v839 = vsel %vm46, %v834, 0.0
    %840 = vadd.xlane.f32.xlu0 %v839
    %v841 = vpop.xlane.xlu0 %840
    %v842 = vsel %vm46, %v836, 0.0
    %843 = vadd.xlane.f32.xlu0 %v842
    %v844 = vpop.xlane.xlu0 %843
    %v845 = vmul.f32 %v841, %v219
    %v846 = vmul.f32 %v844, %v219
    %v847 = vsub.f32 %v829, %v845
    %v848 = vsub.f32 %v830, %v846
    %v849 = vmul.f32 %v847, %v847
    %v850 = vmul.f32 %v848, %v848
    %853 = vrot.lane.b32.xlu0 %v849, 68
    %v854 = vpop.permute.xlu0 %853
    %855 = vrot.lane.b32.xlu0 %v850, 68
    %v856 = vpop.permute.xlu0 %855
    %v859 = vsel %vm46, %v854, 0.0
    %860 = vadd.xlane.f32.xlu0 %v859
    %v861 = vpop.xlane.xlu0 %860
    %v862 = vsel %vm46, %v856, 0.0
    %863 = vadd.xlane.f32.xlu0 %v862
    %v864 = vpop.xlane.xlu0 %863
    %v865 = vmul.f32 %v861, %v219
    %v866 = vmul.f32 %v864, %v219
    %v867 = vadd.f32 %v865, 1e-05
    %v868 = vadd.f32 %v866, 1e-05
    %v869 = vrsqrt.pop %v867
    %v870 = vrsqrt.pop %v868
    %v871 = vmul.f32 %v847, %v869
    %v872 = vmul.f32 %v848, %v870
    %v873 = vmul.f32 %v871, %v254
    %v874 = vmul.f32 %v872, %v254
    %v875 = vadd.f32 %v873, %v264
    %v876 = vadd.f32 %v874, %v264
    %s877 = scalar_lea.vmem %s0, 64
    %v878 = vld [vmem:[%s877] sm:$0xff]
    %v879 = vld [vmem:[%s877 + $0x8] sm:$0xff]
    %882 = vrot.lane.b32.xlu0 %v875, 68
    %v883 = vpop.permute.xlu0 %882
    %884 = vrot.lane.b32.xlu0 %v876, 68
    %v885 = vpop.permute.xlu0 %884
    %v886 = vsel %vm46, %v883, 0
    %v888 = vsel %vm46, %v885, 0
    %890 = vmatprep.subr.mxu0 0.0
    %891 = vmatpush1.msra.mxu0 %v36
    %892 = vmatprep.subr.mxu0 0.0
    %893 = vmatpush1.msra.mxu0 %v37
    %894 = vmatprep.subr.mxu0 0.0
    %895 = vmatpush1.msra.mxu0 %v52
    %896 = vmatprep.subr.mxu0 0.0
    %897 = vmatpush1.msra.mxu0 0.0
    %898 = vmatprep.subr.mxu0 0.0
    %899 = vmatpush1.msra.mxu0 0.0
    %900 = vmatprep.subr.mxu0 0.0
    %901 = vmatpush1.msra.mxu0 0.0
    %902 = vmatprep.subr.mxu0 0.0
    %903 = vmatpush1.msra.mxu0 0.0
    %904 = vmatprep.subr.mxu0 0.0
    %905 = vmatpush1.msra.mxu0 0.0
    %906 = vmatprep.subr.mxu0 0.0
    %907 = vmatpush1.msra.mxu0 0.0
    %908 = vmatprep.subr.mxu0 0.0
    %909 = vmatpush1.msra.mxu0 0.0
    %910 = vmatprep.subr.mxu0 0.0
    %911 = vmatpush1.msra.mxu0 0.0
    %912 = vmatprep.subr.mxu0 0.0
    %913 = vmatpush1.msra.mxu0 0.0
    %914 = vmatprep.subr.mxu0 0.0
    %915 = vmatpush1.msra.mxu0 0.0
    %916 = vmatprep.subr.mxu0 0.0
    %917 = vmatpush1.msra.mxu0 0.0
    %918 = vmatprep.subr.mxu0 0.0
    %919 = vmatpush1.msra.mxu0 0.0
    %920 = vmatprep.subr.mxu0 0.0
    %921 = vmatpush1.msra.mxu0 0.0
    %922 = vmatprep.subr.mxu0 0.0
    %923 = vmatpush1.msra.mxu0 0.0
    %924 = vmatprep.subr.mxu0 0.0
    %925 = vmatpush1.msra.mxu0 0.0
    %926 = vmatprep.subr.mxu0 0.0
    %927 = vmatpush1.msra.mxu0 0.0
    %928 = vmatprep.subr.mxu0 0.0
    %929 = vmatpush1.msra.mxu0 0.0
    %930 = vmatprep.subr.mxu0 0.0
    %931 = vmatpush1.msra.mxu0 0.0
    %932 = vmatprep.subr.mxu0 0.0
    %933 = vmatpush1.msra.mxu0 0.0
    %934 = vmatprep.subr.mxu0 0.0
    %935 = vmatpush1.msra.mxu0 0.0
    %936 = vmatprep.subr.mxu0 0.0
    %937 = vmatpush1.msra.mxu0 0.0
    %938 = vmatprep.subr.mxu0 0.0
    %939 = vmatpush1.msra.mxu0 0.0
    %940 = vmatprep.subr.mxu0 0.0
    %941 = vmatpush1.msra.mxu0 0.0
    %942 = vmatprep.subr.mxu0 0.0
    %943 = vmatpush1.msra.mxu0 0.0
    %944 = vmatprep.subr.mxu0 0.0
    %945 = vmatpush1.msra.mxu0 0.0
    %946 = vmatprep.subr.mxu0 0.0
    %947 = vmatpush1.msra.mxu0 0.0
    %948 = vmatprep.subr.mxu0 0.0
    %949 = vmatpush1.msra.mxu0 0.0
    %950 = vmatprep.subr.mxu0 0.0
    %951 = vmatpush1.msra.mxu0 0.0
    %952 = vmatprep.subr.mxu0 0.0
    %953 = vmatpush1.msra.mxu0 0.0
    %954 = vmatprep.mubr.f32.mxu0 0.0
    %955 = vmatmul.mubr.f32.gmra.mrb[0].mxu0 %v886
    %v956 = vpop.f32.mrb[0].mxu0
    %v957 = vadd.f32 0.0, %v956
    %v958 = vpop.f32.mrb[0].mxu0
    %959 = vmatprep.mubr.f32.mxu0 0.0
    %960 = vmatmul.mubr.f32.gmra.mrb[0].mxu0 %v888
    %v961 = vpop.f32.mrb[0].mxu0
    %v962 = vadd.f32 0.0, %v961
    %v963 = vpop.f32.mrb[0].mxu0
    %964 = vdwg.mxu0
    %v965 = vadd.f32 %v878, %v957
    %v966 = vadd.f32 %v879, %v962
    %v967 = vxor.u32 %v965, 2147483648
    %v968 = vxor.u32 %v966, 2147483648
    %v969 = vmul.f32 %v967, 1.442695
    %v970 = vpow.pop %v969
    %v971 = vmul.f32 %v968, 1.442695
    %v972 = vpow.pop %v971
    %v973 = vadd.f32 %v970, 1.0
    %v974 = vadd.f32 %v972, 1.0
    %v975 = vrcp.pop %v973
    %v976 = vmul.f32 1.0, %v975
    %v977 = vrcp.pop %v974
    %v978 = vmul.f32 1.0, %v977
    %v979 = vtanh.pop %v965
    %v980 = vtanh.pop %v966
    %v981 = vmul.f32 %v976, %v798
    %v982 = vmul.f32 %v978, %v799
    %985 = vrot.lane.b32.xlu0 %v979, 88
    %v986 = vpop.permute.xlu0 %985
    %987 = vrot.lane.b32.xlu0 %v980, 88
    %v988 = vpop.permute.xlu0 %987
    %v991 = vmul.f32 %v976, %v986
    %v992 = vmul.f32 %v978, %v988
    %995 = vrot.lane.b32.xlu0 %v991, 20
    %v996 = vpop.permute.xlu0 %995
    %997 = vrot.lane.b32.xlu0 %v992, 20
    %v998 = vpop.permute.xlu0 %997
    %v1001 = vadd.f32 %v981, %v996
    %v1002 = vadd.f32 %v982, %v998
    %v1003 = vtanh.pop %v1001
    %v1004 = vtanh.pop %v1002
    %1007 = vrot.lane.b32.xlu0 %v1003, 40
    %v1008 = vpop.permute.xlu0 %1007
    %1009 = vrot.lane.b32.xlu0 %v1004, 40
    %v1010 = vpop.permute.xlu0 %1009
    %v1013 = vmul.f32 %v976, %v1008
    %v1014 = vmul.f32 %v978, %v1010
    %v1015 = vsub.f32 %v1013, %v185
    %v1016 = vsub.f32 %v1014, %v185
    %s1017 = scalar_lea.vmem %s2, 64
    %v1018 = vld [vmem:[%s1017] sm:$0xff]
    %v1019 = vld [vmem:[%s1017 + $0x8] sm:$0xff]
    %1022 = vrot.lane.b32.xlu0 %v1018, 60
    %v1023 = vpop.permute.xlu0 %1022
    %1024 = vrot.lane.b32.xlu0 %v1019, 60
    %v1025 = vpop.permute.xlu0 %1024
    %v1028 = vmul.f32 %v1015, %v1023
    %v1029 = vmul.f32 %v1016, %v1025
    %v1030 = vadd.f32 %v1028, %v185
    %v1031 = vadd.f32 %v1029, %v185
    %v1032 = vadd.f32 %v1030, %v875
    %v1033 = vadd.f32 %v1031, %v876
    %1036 = vrot.lane.b32.xlu0 %v1032, 68
    %v1037 = vpop.permute.xlu0 %1036
    %1038 = vrot.lane.b32.xlu0 %v1033, 68
    %v1039 = vpop.permute.xlu0 %1038
    %v1042 = vsel %vm46, %v1037, 0.0
    %1043 = vadd.xlane.f32.xlu0 %v1042
    %v1044 = vpop.xlane.xlu0 %1043
    %v1045 = vsel %vm46, %v1039, 0.0
    %1046 = vadd.xlane.f32.xlu0 %v1045
    %v1047 = vpop.xlane.xlu0 %1046
    %v1048 = vmul.f32 %v1044, %v219
    %v1049 = vmul.f32 %v1047, %v219
    %v1050 = vsub.f32 %v1032, %v1048
    %v1051 = vsub.f32 %v1033, %v1049
    %v1052 = vmul.f32 %v1050, %v1050
    %v1053 = vmul.f32 %v1051, %v1051
    %1056 = vrot.lane.b32.xlu0 %v1052, 68
    %v1057 = vpop.permute.xlu0 %1056
    %1058 = vrot.lane.b32.xlu0 %v1053, 68
    %v1059 = vpop.permute.xlu0 %1058
    %v1062 = vsel %vm46, %v1057, 0.0
    %1063 = vadd.xlane.f32.xlu0 %v1062
    %v1064 = vpop.xlane.xlu0 %1063
    %v1065 = vsel %vm46, %v1059, 0.0
    %1066 = vadd.xlane.f32.xlu0 %v1065
    %v1067 = vpop.xlane.xlu0 %1066
    %v1068 = vmul.f32 %v1064, %v219
    %v1069 = vmul.f32 %v1067, %v219
    %v1070 = vadd.f32 %v1068, 1e-05
    %v1071 = vadd.f32 %v1069, 1e-05
    %v1072 = vrsqrt.pop %v1070
    %v1073 = vrsqrt.pop %v1071
    %v1074 = vmul.f32 %v1050, %v1072
    %v1075 = vmul.f32 %v1051, %v1073
    %v1076 = vmul.f32 %v1074, %v254
    %v1077 = vmul.f32 %v1075, %v254
    %v1078 = vadd.f32 %v1076, %v264
    %v1079 = vadd.f32 %v1077, %v264
    %s1080 = scalar_lea.vmem %s0, 80
    %v1081 = vld [vmem:[%s1080] sm:$0xff]
    %v1082 = vld [vmem:[%s1080 + $0x8] sm:$0xff]
    %1085 = vrot.lane.b32.xlu0 %v1078, 68
    %v1086 = vpop.permute.xlu0 %1085
    %1087 = vrot.lane.b32.xlu0 %v1079, 68
    %v1088 = vpop.permute.xlu0 %1087
    %v1089 = vsel %vm46, %v1086, 0
    %v1091 = vsel %vm46, %v1088, 0
    %1093 = vmatprep.subr.mxu0 0.0
    %1094 = vmatpush1.msra.mxu0 %v36
    %1095 = vmatprep.subr.mxu0 0.0
    %1096 = vmatpush1.msra.mxu0 %v37
    %1097 = vmatprep.subr.mxu0 0.0
    %1098 = vmatpush1.msra.mxu0 %v52
    %1099 = vmatprep.subr.mxu0 0.0
    %1100 = vmatpush1.msra.mxu0 0.0
    %1101 = vmatprep.subr.mxu0 0.0
    %1102 = vmatpush1.msra.mxu0 0.0
    %1103 = vmatprep.subr.mxu0 0.0
    %1104 = vmatpush1.msra.mxu0 0.0
    %1105 = vmatprep.subr.mxu0 0.0
    %1106 = vmatpush1.msra.mxu0 0.0
    %1107 = vmatprep.subr.mxu0 0.0
    %1108 = vmatpush1.msra.mxu0 0.0
    %1109 = vmatprep.subr.mxu0 0.0
    %1110 = vmatpush1.msra.mxu0 0.0
    %1111 = vmatprep.subr.mxu0 0.0
    %1112 = vmatpush1.msra.mxu0 0.0
    %1113 = vmatprep.subr.mxu0 0.0
    %1114 = vmatpush1.msra.mxu0 0.0
    %1115 = vmatprep.subr.mxu0 0.0
    %1116 = vmatpush1.msra.mxu0 0.0
    %1117 = vmatprep.subr.mxu0 0.0
    %1118 = vmatpush1.msra.mxu0 0.0
    %1119 = vmatprep.subr.mxu0 0.0
    %1120 = vmatpush1.msra.mxu0 0.0
    %1121 = vmatprep.subr.mxu0 0.0
    %1122 = vmatpush1.msra.mxu0 0.0
    %1123 = vmatprep.subr.mxu0 0.0
    %1124 = vmatpush1.msra.mxu0 0.0
    %1125 = vmatprep.subr.mxu0 0.0
    %1126 = vmatpush1.msra.mxu0 0.0
    %1127 = vmatprep.subr.mxu0 0.0
    %1128 = vmatpush1.msra.mxu0 0.0
    %1129 = vmatprep.subr.mxu0 0.0
    %1130 = vmatpush1.msra.mxu0 0.0
    %1131 = vmatprep.subr.mxu0 0.0
    %1132 = vmatpush1.msra.mxu0 0.0
    %1133 = vmatprep.subr.mxu0 0.0
    %1134 = vmatpush1.msra.mxu0 0.0
    %1135 = vmatprep.subr.mxu0 0.0
    %1136 = vmatpush1.msra.mxu0 0.0
    %1137 = vmatprep.subr.mxu0 0.0
    %1138 = vmatpush1.msra.mxu0 0.0
    %1139 = vmatprep.subr.mxu0 0.0
    %1140 = vmatpush1.msra.mxu0 0.0
    %1141 = vmatprep.subr.mxu0 0.0
    %1142 = vmatpush1.msra.mxu0 0.0
    %1143 = vmatprep.subr.mxu0 0.0
    %1144 = vmatpush1.msra.mxu0 0.0
    %1145 = vmatprep.subr.mxu0 0.0
    %1146 = vmatpush1.msra.mxu0 0.0
    %1147 = vmatprep.subr.mxu0 0.0
    %1148 = vmatpush1.msra.mxu0 0.0
    %1149 = vmatprep.subr.mxu0 0.0
    %1150 = vmatpush1.msra.mxu0 0.0
    %1151 = vmatprep.subr.mxu0 0.0
    %1152 = vmatpush1.msra.mxu0 0.0
    %1153 = vmatprep.subr.mxu0 0.0
    %1154 = vmatpush1.msra.mxu0 0.0
    %1155 = vmatprep.subr.mxu0 0.0
    %1156 = vmatpush1.msra.mxu0 0.0
    %1157 = vmatprep.mubr.f32.mxu0 0.0
    %1158 = vmatmul.mubr.f32.gmra.mrb[0].mxu0 %v1089
    %v1159 = vpop.f32.mrb[0].mxu0
    %v1160 = vadd.f32 0.0, %v1159
    %v1161 = vpop.f32.mrb[0].mxu0
    %1162 = vmatprep.mubr.f32.mxu0 0.0
    %1163 = vmatmul.mubr.f32.gmra.mrb[0].mxu0 %v1091
    %v1164 = vpop.f32.mrb[0].mxu0
    %v1165 = vadd.f32 0.0, %v1164
    %v1166 = vpop.f32.mrb[0].mxu0
    %1167 = vdwg.mxu0
    %v1168 = vadd.f32 %v1081, %v1160
    %v1169 = vadd.f32 %v1082, %v1165
    %v1170 = vxor.u32 %v1168, 2147483648
    %v1171 = vxor.u32 %v1169, 2147483648
    %v1172 = vmul.f32 %v1170, 1.442695
    %v1173 = vpow.pop %v1172
    %v1174 = vmul.f32 %v1171, 1.442695
    %v1175 = vpow.pop %v1174
    %v1176 = vadd.f32 %v1173, 1.0
    %v1177 = vadd.f32 %v1175, 1.0
    %v1178 = vrcp.pop %v1176
    %v1179 = vmul.f32 1.0, %v1178
    %v1180 = vrcp.pop %v1177
    %v1181 = vmul.f32 1.0, %v1180
    %v1182 = vtanh.pop %v1168
    %v1183 = vtanh.pop %v1169
    %v1184 = vmul.f32 %v1179, %v1001
    %v1185 = vmul.f32 %v1181, %v1002
    %1188 = vrot.lane.b32.xlu0 %v1182, 88
    %v1189 = vpop.permute.xlu0 %1188
    %1190 = vrot.lane.b32.xlu0 %v1183, 88
    %v1191 = vpop.permute.xlu0 %1190
    %v1194 = vmul.f32 %v1179, %v1189
    %v1195 = vmul.f32 %v1181, %v1191
    %1198 = vrot.lane.b32.xlu0 %v1194, 20
    %v1199 = vpop.permute.xlu0 %1198
    %1200 = vrot.lane.b32.xlu0 %v1195, 20
    %v1201 = vpop.permute.xlu0 %1200
    %v1204 = vadd.f32 %v1184, %v1199
    %v1205 = vadd.f32 %v1185, %v1201
    %v1206 = vtanh.pop %v1204
    %v1207 = vtanh.pop %v1205
    %1210 = vrot.lane.b32.xlu0 %v1206, 40
    %v1211 = vpop.permute.xlu0 %1210
    %1212 = vrot.lane.b32.xlu0 %v1207, 40
    %v1213 = vpop.permute.xlu0 %1212
    %v1216 = vmul.f32 %v1179, %v1211
    %v1217 = vmul.f32 %v1181, %v1213
    %v1218 = vsub.f32 %v1216, %v185
    %v1219 = vsub.f32 %v1217, %v185
    %s1220 = scalar_lea.vmem %s2, 80
    %v1221 = vld [vmem:[%s1220] sm:$0xff]
    %v1222 = vld [vmem:[%s1220 + $0x8] sm:$0xff]
    %1225 = vrot.lane.b32.xlu0 %v1221, 60
    %v1226 = vpop.permute.xlu0 %1225
    %1227 = vrot.lane.b32.xlu0 %v1222, 60
    %v1228 = vpop.permute.xlu0 %1227
    %v1231 = vmul.f32 %v1218, %v1226
    %v1232 = vmul.f32 %v1219, %v1228
    %v1233 = vadd.f32 %v1231, %v185
    %v1234 = vadd.f32 %v1232, %v185
    %v1235 = vadd.f32 %v1233, %v1078
    %v1236 = vadd.f32 %v1234, %v1079
    %1239 = vrot.lane.b32.xlu0 %v1235, 68
    %v1240 = vpop.permute.xlu0 %1239
    %1241 = vrot.lane.b32.xlu0 %v1236, 68
    %v1242 = vpop.permute.xlu0 %1241
    %v1245 = vsel %vm46, %v1240, 0.0
    %1246 = vadd.xlane.f32.xlu0 %v1245
    %v1247 = vpop.xlane.xlu0 %1246
    %v1248 = vsel %vm46, %v1242, 0.0
    %1249 = vadd.xlane.f32.xlu0 %v1248
    %v1250 = vpop.xlane.xlu0 %1249
    %v1251 = vmul.f32 %v1247, %v219
    %v1252 = vmul.f32 %v1250, %v219
    %v1253 = vsub.f32 %v1235, %v1251
    %v1254 = vsub.f32 %v1236, %v1252
    %v1255 = vmul.f32 %v1253, %v1253
    %v1256 = vmul.f32 %v1254, %v1254
    %1259 = vrot.lane.b32.xlu0 %v1255, 68
    %v1260 = vpop.permute.xlu0 %1259
    %1261 = vrot.lane.b32.xlu0 %v1256, 68
    %v1262 = vpop.permute.xlu0 %1261
    %v1265 = vsel %vm46, %v1260, 0.0
    %1266 = vadd.xlane.f32.xlu0 %v1265
    %v1267 = vpop.xlane.xlu0 %1266
    %v1268 = vsel %vm46, %v1262, 0.0
    %1269 = vadd.xlane.f32.xlu0 %v1268
    %v1270 = vpop.xlane.xlu0 %1269
    %v1271 = vmul.f32 %v1267, %v219
    %v1272 = vmul.f32 %v1270, %v219
    %v1273 = vadd.f32 %v1271, 1e-05
    %v1274 = vadd.f32 %v1272, 1e-05
    %v1275 = vrsqrt.pop %v1273
    %v1276 = vrsqrt.pop %v1274
    %v1277 = vmul.f32 %v1253, %v1275
    %v1278 = vmul.f32 %v1254, %v1276
    %v1279 = vmul.f32 %v1277, %v254
    %v1280 = vmul.f32 %v1278, %v254
    %v1281 = vadd.f32 %v1279, %v264
    %v1282 = vadd.f32 %v1280, %v264
    %s1283 = scalar_lea.vmem %s0, 96
    %v1284 = vld [vmem:[%s1283] sm:$0xff]
    %v1285 = vld [vmem:[%s1283 + $0x8] sm:$0xff]
    %1288 = vrot.lane.b32.xlu0 %v1281, 68
    %v1289 = vpop.permute.xlu0 %1288
    %1290 = vrot.lane.b32.xlu0 %v1282, 68
    %v1291 = vpop.permute.xlu0 %1290
    %v1292 = vsel %vm46, %v1289, 0
    %v1294 = vsel %vm46, %v1291, 0
    %1296 = vmatprep.subr.mxu0 0.0
    %1297 = vmatpush1.msra.mxu0 %v36
    %1298 = vmatprep.subr.mxu0 0.0
    %1299 = vmatpush1.msra.mxu0 %v37
    %1300 = vmatprep.subr.mxu0 0.0
    %1301 = vmatpush1.msra.mxu0 %v52
    %1302 = vmatprep.subr.mxu0 0.0
    %1303 = vmatpush1.msra.mxu0 0.0
    %1304 = vmatprep.subr.mxu0 0.0
    %1305 = vmatpush1.msra.mxu0 0.0
    %1306 = vmatprep.subr.mxu0 0.0
    %1307 = vmatpush1.msra.mxu0 0.0
    %1308 = vmatprep.subr.mxu0 0.0
    %1309 = vmatpush1.msra.mxu0 0.0
    %1310 = vmatprep.subr.mxu0 0.0
    %1311 = vmatpush1.msra.mxu0 0.0
    %1312 = vmatprep.subr.mxu0 0.0
    %1313 = vmatpush1.msra.mxu0 0.0
    %1314 = vmatprep.subr.mxu0 0.0
    %1315 = vmatpush1.msra.mxu0 0.0
    %1316 = vmatprep.subr.mxu0 0.0
    %1317 = vmatpush1.msra.mxu0 0.0
    %1318 = vmatprep.subr.mxu0 0.0
    %1319 = vmatpush1.msra.mxu0 0.0
    %1320 = vmatprep.subr.mxu0 0.0
    %1321 = vmatpush1.msra.mxu0 0.0
    %1322 = vmatprep.subr.mxu0 0.0
    %1323 = vmatpush1.msra.mxu0 0.0
    %1324 = vmatprep.subr.mxu0 0.0
    %1325 = vmatpush1.msra.mxu0 0.0
    %1326 = vmatprep.subr.mxu0 0.0
    %1327 = vmatpush1.msra.mxu0 0.0
    %1328 = vmatprep.subr.mxu0 0.0
    %1329 = vmatpush1.msra.mxu0 0.0
    %1330 = vmatprep.subr.mxu0 0.0
    %1331 = vmatpush1.msra.mxu0 0.0
    %1332 = vmatprep.subr.mxu0 0.0
    %1333 = vmatpush1.msra.mxu0 0.0
    %1334 = vmatprep.subr.mxu0 0.0
    %1335 = vmatpush1.msra.mxu0 0.0
    %1336 = vmatprep.subr.mxu0 0.0
    %1337 = vmatpush1.msra.mxu0 0.0
    %1338 = vmatprep.subr.mxu0 0.0
    %1339 = vmatpush1.msra.mxu0 0.0
    %1340 = vmatprep.subr.mxu0 0.0
    %1341 = vmatpush1.msra.mxu0 0.0
    %1342 = vmatprep.subr.mxu0 0.0
    %1343 = vmatpush1.msra.mxu0 0.0
    %1344 = vmatprep.subr.mxu0 0.0
    %1345 = vmatpush1.msra.mxu0 0.0
    %1346 = vmatprep.subr.mxu0 0.0
    %1347 = vmatpush1.msra.mxu0 0.0
    %1348 = vmatprep.subr.mxu0 0.0
    %1349 = vmatpush1.msra.mxu0 0.0
    %1350 = vmatprep.subr.mxu0 0.0
    %1351 = vmatpush1.msra.mxu0 0.0
    %1352 = vmatprep.subr.mxu0 0.0
    %1353 = vmatpush1.msra.mxu0 0.0
    %1354 = vmatprep.subr.mxu0 0.0
    %1355 = vmatpush1.msra.mxu0 0.0
    %1356 = vmatprep.subr.mxu0 0.0
    %1357 = vmatpush1.msra.mxu0 0.0
    %1358 = vmatprep.subr.mxu0 0.0
    %1359 = vmatpush1.msra.mxu0 0.0
    %1360 = vmatprep.mubr.f32.mxu0 0.0
    %1361 = vmatmul.mubr.f32.gmra.mrb[0].mxu0 %v1292
    %v1362 = vpop.f32.mrb[0].mxu0
    %v1363 = vadd.f32 0.0, %v1362
    %v1364 = vpop.f32.mrb[0].mxu0
    %1365 = vmatprep.mubr.f32.mxu0 0.0
    %1366 = vmatmul.mubr.f32.gmra.mrb[0].mxu0 %v1294
    %v1367 = vpop.f32.mrb[0].mxu0
    %v1368 = vadd.f32 0.0, %v1367
    %v1369 = vpop.f32.mrb[0].mxu0
    %1370 = vdwg.mxu0
    %v1371 = vadd.f32 %v1284, %v1363
    %v1372 = vadd.f32 %v1285, %v1368
    %v1373 = vxor.u32 %v1371, 2147483648
    %v1374 = vxor.u32 %v1372, 2147483648
    %v1375 = vmul.f32 %v1373, 1.442695
    %v1376 = vpow.pop %v1375
    %v1377 = vmul.f32 %v1374, 1.442695
    %v1378 = vpow.pop %v1377
    %v1379 = vadd.f32 %v1376, 1.0
    %v1380 = vadd.f32 %v1378, 1.0
    %v1381 = vrcp.pop %v1379
    %v1382 = vmul.f32 1.0, %v1381
    %v1383 = vrcp.pop %v1380
    %v1384 = vmul.f32 1.0, %v1383
    %v1385 = vtanh.pop %v1371
    %v1386 = vtanh.pop %v1372
    %v1387 = vmul.f32 %v1382, %v1204
    %v1388 = vmul.f32 %v1384, %v1205
    %1391 = vrot.lane.b32.xlu0 %v1385, 88
    %v1392 = vpop.permute.xlu0 %1391
    %1393 = vrot.lane.b32.xlu0 %v1386, 88
    %v1394 = vpop.permute.xlu0 %1393
    %v1397 = vmul.f32 %v1382, %v1392
    %v1398 = vmul.f32 %v1384, %v1394
    %1401 = vrot.lane.b32.xlu0 %v1397, 20
    %v1402 = vpop.permute.xlu0 %1401
    %1403 = vrot.lane.b32.xlu0 %v1398, 20
    %v1404 = vpop.permute.xlu0 %1403
    %v1407 = vadd.f32 %v1387, %v1402
    %v1408 = vadd.f32 %v1388, %v1404
    %v1409 = vtanh.pop %v1407
    %v1410 = vtanh.pop %v1408
    %1413 = vrot.lane.b32.xlu0 %v1409, 40
    %v1414 = vpop.permute.xlu0 %1413
    %1415 = vrot.lane.b32.xlu0 %v1410, 40
    %v1416 = vpop.permute.xlu0 %1415
    %v1419 = vmul.f32 %v1382, %v1414
    %v1420 = vmul.f32 %v1384, %v1416
    %v1421 = vsub.f32 %v1419, %v185
    %v1422 = vsub.f32 %v1420, %v185
    %s1423 = scalar_lea.vmem %s2, 96
    %v1424 = vld [vmem:[%s1423] sm:$0xff]
    %v1425 = vld [vmem:[%s1423 + $0x8] sm:$0xff]
    %1428 = vrot.lane.b32.xlu0 %v1424, 60
    %v1429 = vpop.permute.xlu0 %1428
    %1430 = vrot.lane.b32.xlu0 %v1425, 60
    %v1431 = vpop.permute.xlu0 %1430
    %v1434 = vmul.f32 %v1421, %v1429
    %v1435 = vmul.f32 %v1422, %v1431
    %v1436 = vadd.f32 %v1434, %v185
    %v1437 = vadd.f32 %v1435, %v185
    %v1438 = vadd.f32 %v1436, %v1281
    %v1439 = vadd.f32 %v1437, %v1282
    %1442 = vrot.lane.b32.xlu0 %v1438, 68
    %v1443 = vpop.permute.xlu0 %1442
    %1444 = vrot.lane.b32.xlu0 %v1439, 68
    %v1445 = vpop.permute.xlu0 %1444
    %v1448 = vsel %vm46, %v1443, 0.0
    %1449 = vadd.xlane.f32.xlu0 %v1448
    %v1450 = vpop.xlane.xlu0 %1449
    %v1451 = vsel %vm46, %v1445, 0.0
    %1452 = vadd.xlane.f32.xlu0 %v1451
    %v1453 = vpop.xlane.xlu0 %1452
    %v1454 = vmul.f32 %v1450, %v219
    %v1455 = vmul.f32 %v1453, %v219
    %v1456 = vsub.f32 %v1438, %v1454
    %v1457 = vsub.f32 %v1439, %v1455
    %v1458 = vmul.f32 %v1456, %v1456
    %v1459 = vmul.f32 %v1457, %v1457
    %1462 = vrot.lane.b32.xlu0 %v1458, 68
    %v1463 = vpop.permute.xlu0 %1462
    %1464 = vrot.lane.b32.xlu0 %v1459, 68
    %v1465 = vpop.permute.xlu0 %1464
    %v1468 = vsel %vm46, %v1463, 0.0
    %1469 = vadd.xlane.f32.xlu0 %v1468
    %v1470 = vpop.xlane.xlu0 %1469
    %v1471 = vsel %vm46, %v1465, 0.0
    %1472 = vadd.xlane.f32.xlu0 %v1471
    %v1473 = vpop.xlane.xlu0 %1472
    %v1474 = vmul.f32 %v1470, %v219
    %v1475 = vmul.f32 %v1473, %v219
    %v1476 = vadd.f32 %v1474, 1e-05
    %v1477 = vadd.f32 %v1475, 1e-05
    %v1478 = vrsqrt.pop %v1476
    %v1479 = vrsqrt.pop %v1477
    %v1480 = vmul.f32 %v1456, %v1478
    %v1481 = vmul.f32 %v1457, %v1479
    %v1482 = vmul.f32 %v1480, %v254
    %v1483 = vmul.f32 %v1481, %v254
    %v1484 = vadd.f32 %v1482, %v264
    %v1485 = vadd.f32 %v1483, %v264
    %s1486 = scalar_lea.vmem %s0, 112
    %v1487 = vld [vmem:[%s1486] sm:$0xff]
    %v1488 = vld [vmem:[%s1486 + $0x8] sm:$0xff]
    %1491 = vrot.lane.b32.xlu0 %v1484, 68
    %v1492 = vpop.permute.xlu0 %1491
    %1493 = vrot.lane.b32.xlu0 %v1485, 68
    %v1494 = vpop.permute.xlu0 %1493
    %v1495 = vsel %vm46, %v1492, 0
    %v1497 = vsel %vm46, %v1494, 0
    %1499 = vmatprep.subr.mxu0 0.0
    %1500 = vmatpush1.msra.mxu0 %v36
    %1501 = vmatprep.subr.mxu0 0.0
    %1502 = vmatpush1.msra.mxu0 %v37
    %1503 = vmatprep.subr.mxu0 0.0
    %1504 = vmatpush1.msra.mxu0 %v52
    %1505 = vmatprep.subr.mxu0 0.0
    %1506 = vmatpush1.msra.mxu0 0.0
    %1507 = vmatprep.subr.mxu0 0.0
    %1508 = vmatpush1.msra.mxu0 0.0
    %1509 = vmatprep.subr.mxu0 0.0
    %1510 = vmatpush1.msra.mxu0 0.0
    %1511 = vmatprep.subr.mxu0 0.0
    %1512 = vmatpush1.msra.mxu0 0.0
    %1513 = vmatprep.subr.mxu0 0.0
    %1514 = vmatpush1.msra.mxu0 0.0
    %1515 = vmatprep.subr.mxu0 0.0
    %1516 = vmatpush1.msra.mxu0 0.0
    %1517 = vmatprep.subr.mxu0 0.0
    %1518 = vmatpush1.msra.mxu0 0.0
    %1519 = vmatprep.subr.mxu0 0.0
    %1520 = vmatpush1.msra.mxu0 0.0
    %1521 = vmatprep.subr.mxu0 0.0
    %1522 = vmatpush1.msra.mxu0 0.0
    %1523 = vmatprep.subr.mxu0 0.0
    %1524 = vmatpush1.msra.mxu0 0.0
    %1525 = vmatprep.subr.mxu0 0.0
    %1526 = vmatpush1.msra.mxu0 0.0
    %1527 = vmatprep.subr.mxu0 0.0
    %1528 = vmatpush1.msra.mxu0 0.0
    %1529 = vmatprep.subr.mxu0 0.0
    %1530 = vmatpush1.msra.mxu0 0.0
    %1531 = vmatprep.subr.mxu0 0.0
    %1532 = vmatpush1.msra.mxu0 0.0
    %1533 = vmatprep.subr.mxu0 0.0
    %1534 = vmatpush1.msra.mxu0 0.0
    %1535 = vmatprep.subr.mxu0 0.0
    %1536 = vmatpush1.msra.mxu0 0.0
    %1537 = vmatprep.subr.mxu0 0.0
    %1538 = vmatpush1.msra.mxu0 0.0
    %1539 = vmatprep.subr.mxu0 0.0
    %1540 = vmatpush1.msra.mxu0 0.0
    %1541 = vmatprep.subr.mxu0 0.0
    %1542 = vmatpush1.msra.mxu0 0.0
    %1543 = vmatprep.subr.mxu0 0.0
    %1544 = vmatpush1.msra.mxu0 0.0
    %1545 = vmatprep.subr.mxu0 0.0
    %1546 = vmatpush1.msra.mxu0 0.0
    %1547 = vmatprep.subr.mxu0 0.0
    %1548 = vmatpush1.msra.mxu0 0.0
    %1549 = vmatprep.subr.mxu0 0.0
    %1550 = vmatpush1.msra.mxu0 0.0
    %1551 = vmatprep.subr.mxu0 0.0
    %1552 = vmatpush1.msra.mxu0 0.0
    %1553 = vmatprep.subr.mxu0 0.0
    %1554 = vmatpush1.msra.mxu0 0.0
    %1555 = vmatprep.subr.mxu0 0.0
    %1556 = vmatpush1.msra.mxu0 0.0
    %1557 = vmatprep.subr.mxu0 0.0
    %1558 = vmatpush1.msra.mxu0 0.0
    %1559 = vmatprep.subr.mxu0 0.0
    %1560 = vmatpush1.msra.mxu0 0.0
    %1561 = vmatprep.subr.mxu0 0.0
    %1562 = vmatpush1.msra.mxu0 0.0
    %1563 = vmatprep.mubr.f32.mxu0 0.0
    %1564 = vmatmul.mubr.f32.gmra.mrb[0].mxu0 %v1495
    %v1565 = vpop.f32.mrb[0].mxu0
    %v1566 = vadd.f32 0.0, %v1565
    %v1567 = vpop.f32.mrb[0].mxu0
    %1568 = vmatprep.mubr.f32.mxu0 0.0
    %1569 = vmatmul.mubr.f32.gmra.mrb[0].mxu0 %v1497
    %v1570 = vpop.f32.mrb[0].mxu0
    %v1571 = vadd.f32 0.0, %v1570
    %v1572 = vpop.f32.mrb[0].mxu0
    %1573 = vdwg.mxu0
    %v1574 = vadd.f32 %v1487, %v1566
    %v1575 = vadd.f32 %v1488, %v1571
    %v1576 = vxor.u32 %v1574, 2147483648
    %v1577 = vxor.u32 %v1575, 2147483648
    %v1578 = vmul.f32 %v1576, 1.442695
    %v1579 = vpow.pop %v1578
    %v1580 = vmul.f32 %v1577, 1.442695
    %v1581 = vpow.pop %v1580
    %v1582 = vadd.f32 %v1579, 1.0
    %v1583 = vadd.f32 %v1581, 1.0
    %v1584 = vrcp.pop %v1582
    %v1585 = vmul.f32 1.0, %v1584
    %v1586 = vrcp.pop %v1583
    %v1587 = vmul.f32 1.0, %v1586
    %v1588 = vtanh.pop %v1574
    %v1589 = vtanh.pop %v1575
    %v1590 = vmul.f32 %v1585, %v1407
    %v1591 = vmul.f32 %v1587, %v1408
    %1594 = vrot.lane.b32.xlu0 %v1588, 88
    %v1595 = vpop.permute.xlu0 %1594
    %1596 = vrot.lane.b32.xlu0 %v1589, 88
    %v1597 = vpop.permute.xlu0 %1596
    %v1600 = vmul.f32 %v1585, %v1595
    %v1601 = vmul.f32 %v1587, %v1597
    %1604 = vrot.lane.b32.xlu0 %v1600, 20
    %v1605 = vpop.permute.xlu0 %1604
    %1606 = vrot.lane.b32.xlu0 %v1601, 20
    %v1607 = vpop.permute.xlu0 %1606
    %v1610 = vadd.f32 %v1590, %v1605
    %v1611 = vadd.f32 %v1591, %v1607
    %v1612 = vtanh.pop %v1610
    %v1613 = vtanh.pop %v1611
    %1616 = vrot.lane.b32.xlu0 %v1612, 40
    %v1617 = vpop.permute.xlu0 %1616
    %1618 = vrot.lane.b32.xlu0 %v1613, 40
    %v1619 = vpop.permute.xlu0 %1618
    %v1622 = vmul.f32 %v1585, %v1617
    %v1623 = vmul.f32 %v1587, %v1619
    %v1624 = vsub.f32 %v1622, %v185
    %v1625 = vsub.f32 %v1623, %v185
    %s1626 = scalar_lea.vmem %s2, 112
    %v1627 = vld [vmem:[%s1626] sm:$0xff]
    %v1628 = vld [vmem:[%s1626 + $0x8] sm:$0xff]
    %1631 = vrot.lane.b32.xlu0 %v1627, 60
    %v1632 = vpop.permute.xlu0 %1631
    %1633 = vrot.lane.b32.xlu0 %v1628, 60
    %v1634 = vpop.permute.xlu0 %1633
    %v1637 = vmul.f32 %v1624, %v1632
    %v1638 = vmul.f32 %v1625, %v1634
    %v1639 = vadd.f32 %v1637, %v185
    %v1640 = vadd.f32 %v1638, %v185
    %v1641 = vadd.f32 %v1639, %v1484
    %v1642 = vadd.f32 %v1640, %v1485
    %1645 = vrot.lane.b32.xlu0 %v1641, 68
    %v1646 = vpop.permute.xlu0 %1645
    %1647 = vrot.lane.b32.xlu0 %v1642, 68
    %v1648 = vpop.permute.xlu0 %1647
    %v1651 = vsel %vm46, %v1646, 0.0
    %1652 = vadd.xlane.f32.xlu0 %v1651
    %v1653 = vpop.xlane.xlu0 %1652
    %v1654 = vsel %vm46, %v1648, 0.0
    %1655 = vadd.xlane.f32.xlu0 %v1654
    %v1656 = vpop.xlane.xlu0 %1655
    %v1657 = vmul.f32 %v1653, %v219
    %v1658 = vmul.f32 %v1656, %v219
    %v1659 = vsub.f32 %v1641, %v1657
    %v1660 = vsub.f32 %v1642, %v1658
    %v1661 = vmul.f32 %v1659, %v1659
    %v1662 = vmul.f32 %v1660, %v1660
    %1665 = vrot.lane.b32.xlu0 %v1661, 68
    %v1666 = vpop.permute.xlu0 %1665
    %1667 = vrot.lane.b32.xlu0 %v1662, 68
    %v1668 = vpop.permute.xlu0 %1667
    %v1671 = vsel %vm46, %v1666, 0.0
    %1672 = vadd.xlane.f32.xlu0 %v1671
    %v1673 = vpop.xlane.xlu0 %1672
    %v1674 = vsel %vm46, %v1668, 0.0
    %1675 = vadd.xlane.f32.xlu0 %v1674
    %v1676 = vpop.xlane.xlu0 %1675
    %v1677 = vmul.f32 %v1673, %v219
    %v1678 = vmul.f32 %v1676, %v219
    %v1679 = vadd.f32 %v1677, 1e-05
    %v1680 = vadd.f32 %v1678, 1e-05
    %v1681 = vrsqrt.pop %v1679
    %v1682 = vrsqrt.pop %v1680
    %v1683 = vmul.f32 %v1659, %v1681
    %v1684 = vmul.f32 %v1660, %v1682
    %v1685 = vmul.f32 %v1683, %v254
    %v1686 = vmul.f32 %v1684, %v254
    %v1687 = vadd.f32 %v1685, %v264
    %v1688 = vadd.f32 %v1686, %v264
    %v1690 = vlaneseq
    %v1691 = vshrl.u32 %v1690, 7
    %v1692 = vsub.s32 0, %v1691
    %v1693 = vrot.slane %v42, %v1692
    %1694 = vrot.lane.b32.xlu0 %v1693, 60
    %v1695 = vpop.permute.xlu0 %1694
    %v1697 = vmul.f32 %v266, %v1695
    %v1698 = vmul.f32 %v267, %v1695
    %v1699 = vmul.f32 %v469, %v1695
    %v1700 = vmul.f32 %v470, %v1695
    %v1701 = vmul.f32 %v672, %v1695
    %v1702 = vmul.f32 %v673, %v1695
    %v1703 = vmul.f32 %v875, %v1695
    %v1704 = vmul.f32 %v876, %v1695
    %v1705 = vmul.f32 %v1078, %v1695
    %v1706 = vmul.f32 %v1079, %v1695
    %v1707 = vmul.f32 %v1281, %v1695
    %v1708 = vmul.f32 %v1282, %v1695
    %v1709 = vmul.f32 %v1484, %v1695
    %v1710 = vmul.f32 %v1485, %v1695
    %v1711 = vmul.f32 %v1687, %v1695
    %v1712 = vmul.f32 %v1688, %v1695
    %1729 = vrot.lane.b32.xlu0 %v1697, 68
    %v1730 = vpop.permute.xlu0 %1729
    %1731 = vrot.lane.b32.xlu0 %v1698, 68
    %v1732 = vpop.permute.xlu0 %1731
    %1733 = vrot.lane.b32.xlu0 %v1699, 68
    %v1734 = vpop.permute.xlu0 %1733
    %1735 = vrot.lane.b32.xlu0 %v1700, 68
    %v1736 = vpop.permute.xlu0 %1735
    %1737 = vrot.lane.b32.xlu0 %v1701, 68
    %v1738 = vpop.permute.xlu0 %1737
    %1739 = vrot.lane.b32.xlu0 %v1702, 68
    %v1740 = vpop.permute.xlu0 %1739
    %1741 = vrot.lane.b32.xlu0 %v1703, 68
    %v1742 = vpop.permute.xlu0 %1741
    %1743 = vrot.lane.b32.xlu0 %v1704, 68
    %v1744 = vpop.permute.xlu0 %1743
    %1745 = vrot.lane.b32.xlu0 %v1705, 68
    %v1746 = vpop.permute.xlu0 %1745
    %1747 = vrot.lane.b32.xlu0 %v1706, 68
    %v1748 = vpop.permute.xlu0 %1747
    %1749 = vrot.lane.b32.xlu0 %v1707, 68
    %v1750 = vpop.permute.xlu0 %1749
    %1751 = vrot.lane.b32.xlu0 %v1708, 68
    %v1752 = vpop.permute.xlu0 %1751
    %1753 = vrot.lane.b32.xlu0 %v1709, 68
    %v1754 = vpop.permute.xlu0 %1753
    %1755 = vrot.lane.b32.xlu0 %v1710, 68
    %v1756 = vpop.permute.xlu0 %1755
    %1757 = vrot.lane.b32.xlu0 %v1711, 68
    %v1758 = vpop.permute.xlu0 %1757
    %1759 = vrot.lane.b32.xlu0 %v1712, 68
    %v1760 = vpop.permute.xlu0 %1759
    %v1777 = vsel %vm46, %v1730, 0.0
    %1778 = vadd.xlane.f32.xlu0 %v1777
    %v1779 = vpop.xlane.xlu0 %1778
    %v1780 = vsel %vm46, %v1732, 0.0
    %1781 = vadd.xlane.f32.xlu0 %v1780
    %v1782 = vpop.xlane.xlu0 %1781
    %v1783 = vsel %vm46, %v1734, 0.0
    %1784 = vadd.xlane.f32.xlu0 %v1783
    %v1785 = vpop.xlane.xlu0 %1784
    %v1786 = vsel %vm46, %v1736, 0.0
    %1787 = vadd.xlane.f32.xlu0 %v1786
    %v1788 = vpop.xlane.xlu0 %1787
    %v1789 = vsel %vm46, %v1738, 0.0
    %1790 = vadd.xlane.f32.xlu0 %v1789
    %v1791 = vpop.xlane.xlu0 %1790
    %v1792 = vsel %vm46, %v1740, 0.0
    %1793 = vadd.xlane.f32.xlu0 %v1792
    %v1794 = vpop.xlane.xlu0 %1793
    %v1795 = vsel %vm46, %v1742, 0.0
    %1796 = vadd.xlane.f32.xlu0 %v1795
    %v1797 = vpop.xlane.xlu0 %1796
    %v1798 = vsel %vm46, %v1744, 0.0
    %1799 = vadd.xlane.f32.xlu0 %v1798
    %v1800 = vpop.xlane.xlu0 %1799
    %v1801 = vsel %vm46, %v1746, 0.0
    %1802 = vadd.xlane.f32.xlu0 %v1801
    %v1803 = vpop.xlane.xlu0 %1802
    %v1804 = vsel %vm46, %v1748, 0.0
    %1805 = vadd.xlane.f32.xlu0 %v1804
    %v1806 = vpop.xlane.xlu0 %1805
    %v1807 = vsel %vm46, %v1750, 0.0
    %1808 = vadd.xlane.f32.xlu0 %v1807
    %v1809 = vpop.xlane.xlu0 %1808
    %v1810 = vsel %vm46, %v1752, 0.0
    %1811 = vadd.xlane.f32.xlu0 %v1810
    %v1812 = vpop.xlane.xlu0 %1811
    %v1813 = vsel %vm46, %v1754, 0.0
    %1814 = vadd.xlane.f32.xlu0 %v1813
    %v1815 = vpop.xlane.xlu0 %1814
    %v1816 = vsel %vm46, %v1756, 0.0
    %1817 = vadd.xlane.f32.xlu0 %v1816
    %v1818 = vpop.xlane.xlu0 %1817
    %v1819 = vsel %vm46, %v1758, 0.0
    %1820 = vadd.xlane.f32.xlu0 %v1819
    %v1821 = vpop.xlane.xlu0 %1820
    %v1822 = vsel %vm46, %v1760, 0.0
    %1823 = vadd.xlane.f32.xlu0 %v1822
    %v1824 = vpop.xlane.xlu0 %1823
    %v1826 = vlaneseq
    %v1827 = vshrl.u32 %v1826, 7
    %v1828 = vsub.s32 0, %v1827
    %v1829 = vrot.slane %v43, %v1828
    %1830 = vset.pattern.permute.xlu0 0
    %1831 = vperm.xlu0 %1830, %v1829
    %v1832 = vpop.permute.xlu0 %1831
    %v1834 = vadd.f32 %v1779, %v1832
    %v1835 = vadd.f32 %v1782, %v1832
    %v1836 = vadd.f32 %v1785, %v1832
    %v1837 = vadd.f32 %v1788, %v1832
    %v1838 = vadd.f32 %v1791, %v1832
    %v1839 = vadd.f32 %v1794, %v1832
    %v1840 = vadd.f32 %v1797, %v1832
    %v1841 = vadd.f32 %v1800, %v1832
    %v1842 = vadd.f32 %v1803, %v1832
    %v1843 = vadd.f32 %v1806, %v1832
    %v1844 = vadd.f32 %v1809, %v1832
    %v1845 = vadd.f32 %v1812, %v1832
    %v1846 = vadd.f32 %v1815, %v1832
    %v1847 = vadd.f32 %v1818, %v1832
    %v1848 = vadd.f32 %v1821, %v1832
    %v1849 = vadd.f32 %v1824, %v1832
    %v1866 = vlaneseq
    %v1867 = vand.u32 %v1866, 127
    %v1868 = vlaneseq
    %v1869 = vshrl.u32 %v1868, 7
    %v1870 = vsub.s32 %v1867, %v1869
    %v1871 = vrot.slane %v1834, %v1870
    %v1872 = vadd.s32 %v1867, 4294967288
    %v1873 = vlaneseq
    %v1874 = vshrl.u32 %v1873, 7
    %v1875 = vsub.s32 %v1872, %v1874
    %v1876 = vrot.slane %v1835, %v1875
    %vm1877 = vcmask 130112
    %v1878 = vsel %vm1877, %v1876, %v1871
    %v1879 = vlaneseq
    %v1880 = vshrl.u32 %v1879, 7
    %v1881 = vsub.s32 %v1867, %v1880
    %v1882 = vrot.slane %v1836, %v1881
    %v1883 = vlaneseq
    %v1884 = vshrl.u32 %v1883, 7
    %v1885 = vsub.s32 %v1872, %v1884
    %v1886 = vrot.slane %v1837, %v1885
    %v1887 = vsel %vm1877, %v1886, %v1882
    %v1888 = vlaneseq
    %v1889 = vshrl.u32 %v1888, 7
    %v1890 = vsub.s32 %v1867, %v1889
    %v1891 = vrot.slane %v1838, %v1890
    %v1892 = vlaneseq
    %v1893 = vshrl.u32 %v1892, 7
    %v1894 = vsub.s32 %v1872, %v1893
    %v1895 = vrot.slane %v1839, %v1894
    %v1896 = vsel %vm1877, %v1895, %v1891
    %v1897 = vlaneseq
    %v1898 = vshrl.u32 %v1897, 7
    %v1899 = vsub.s32 %v1867, %v1898
    %v1900 = vrot.slane %v1840, %v1899
    %v1901 = vlaneseq
    %v1902 = vshrl.u32 %v1901, 7
    %v1903 = vsub.s32 %v1872, %v1902
    %v1904 = vrot.slane %v1841, %v1903
    %v1905 = vsel %vm1877, %v1904, %v1900
    %v1906 = vlaneseq
    %v1907 = vshrl.u32 %v1906, 7
    %v1908 = vsub.s32 %v1867, %v1907
    %v1909 = vrot.slane %v1842, %v1908
    %v1910 = vlaneseq
    %v1911 = vshrl.u32 %v1910, 7
    %v1912 = vsub.s32 %v1872, %v1911
    %v1913 = vrot.slane %v1843, %v1912
    %v1914 = vsel %vm1877, %v1913, %v1909
    %v1915 = vlaneseq
    %v1916 = vshrl.u32 %v1915, 7
    %v1917 = vsub.s32 %v1867, %v1916
    %v1918 = vrot.slane %v1844, %v1917
    %v1919 = vlaneseq
    %v1920 = vshrl.u32 %v1919, 7
    %v1921 = vsub.s32 %v1872, %v1920
    %v1922 = vrot.slane %v1845, %v1921
    %v1923 = vsel %vm1877, %v1922, %v1918
    %v1924 = vlaneseq
    %v1925 = vshrl.u32 %v1924, 7
    %v1926 = vsub.s32 %v1867, %v1925
    %v1927 = vrot.slane %v1846, %v1926
    %v1928 = vlaneseq
    %v1929 = vshrl.u32 %v1928, 7
    %v1930 = vsub.s32 %v1872, %v1929
    %v1931 = vrot.slane %v1847, %v1930
    %v1932 = vsel %vm1877, %v1931, %v1927
    %v1933 = vlaneseq
    %v1934 = vshrl.u32 %v1933, 7
    %v1935 = vsub.s32 %v1867, %v1934
    %v1936 = vrot.slane %v1848, %v1935
    %v1937 = vlaneseq
    %v1938 = vshrl.u32 %v1937, 7
    %v1939 = vsub.s32 %v1872, %v1938
    %v1940 = vrot.slane %v1849, %v1939
    %v1941 = vsel %vm1877, %v1940, %v1936
    %vm1942 = vcmask 1041409
    %v1943 = vsel %vm1942, %v1887, %v1878
    %vm1944 = vcmask 1042434
    %v1945 = vsel %vm1944, %v1896, %v1943
    %vm1946 = vcmask 1043459
    %v1947 = vsel %vm1946, %v1905, %v1945
    %vm1948 = vcmask 1044484
    %v1949 = vsel %vm1948, %v1914, %v1947
    %vm1950 = vcmask 1045509
    %v1951 = vsel %vm1950, %v1923, %v1949
    %vm1952 = vcmask 1046534
    %v1953 = vsel %vm1952, %v1932, %v1951
    %vm1954 = vcmask 1047559
    %v1955 = vsel %vm1954, %v1941, %v1953
    %vm1957 = vcmask 130048
    %1958 = vst.msk [vmem:[#allocation3] sm:$0xff] %vm1957, %v1955
    %1961 = vrot.lane.b32.xlu0 %v1687, 68
    %v1962 = vpop.permute.xlu0 %1961
    %1963 = vrot.lane.b32.xlu0 %v1688, 68
    %v1964 = vpop.permute.xlu0 %1963
    %1967 = vst.msk [vmem:[#allocation5] sm:$0xff] %vm46, %v1962
    %1968 = vst.msk [vmem:[#allocation5 + $0x8] sm:$0xff] %vm46, %v1964
    %1971 = vrot.lane.b32.xlu0 %v1610, 108
    %v1972 = vpop.permute.xlu0 %1971
    %1973 = vrot.lane.b32.xlu0 %v1611, 108
    %v1974 = vpop.permute.xlu0 %1973
    %1977 = vst.msk [vmem:[#allocation7] sm:$0xff] %vm46, %v1972
    %1978 = vst.msk [vmem:[#allocation7 + $0x8] sm:$0xff] %vm46, %v1974
    // Predicated region
    $region34: #{neuroflex_forward.1} parent=1 // pred_check
      _
    $region35: #{neuroflex_forward.1} parent=1 // pred_check_branch
      %1980 = sbr.rel (0) target = $region37
    $region36: #{neuroflex_forward.1} parent=1 // pred_region
      %s1982 = ssub.s32 128, 128
      %1983 = vsyncadd [#allocation4], %s1982
      %s1985 = sshll.u32 [#allocation3], 4
      %s1986 = int_to_ptr.vmem [resolvable:$true] %s1985
      %1988 = dma.vmem_to_hbm [thread:$0]  %s1986, 128, %s8, [#allocation4]
    $region37: #{neuroflex_forward.1} parent=1 // pred_fallthru
      _
    // Predicated region
    $region38: #{neuroflex_forward.1} parent=1 // pred_check
      _
    $region39: #{neuroflex_forward.1} parent=1 // pred_check_branch
      %1990 = sbr.rel (0) target = $region41
    $region40: #{neuroflex_forward.1} parent=1 // pred_region
      %s1992 = ssub.s32 256, 256
      %1993 = vsyncadd [#allocation6], %s1992
      %s1994 = sshll.u32 [#allocation5], 4
      %s1995 = int_to_ptr.vmem [resolvable:$true] %s1994
      %2000 = dma.vmem_to_hbm [thread:$0]  %s1995, 256, %s9, [#allocation6], 128, 128, 8
    $region41: #{neuroflex_forward.1} parent=1 // pred_fallthru
      _
    // Predicated region
    $region42: #{neuroflex_forward.1} parent=1 // pred_check
      _
    $region43: #{neuroflex_forward.1} parent=1 // pred_check_branch
      %2002 = sbr.rel (0) target = $region45
    $region44: #{neuroflex_forward.1} parent=1 // pred_region
      %s2004 = ssub.s32 256, 256
      %2005 = vsyncadd [#allocation6], %s2004
      %s2006 = sshll.u32 [#allocation7], 4
      %s2007 = int_to_ptr.vmem [resolvable:$true] %s2006
      %2012 = dma.vmem_to_hbm [thread:$0]  %s2007, 256, %s10, [#allocation6], 128, 128, 8
    $region45: #{neuroflex_forward.1} parent=1 // pred_fallthru
      _
    // Predicated region
    $region46: #{neuroflex_forward.1} parent=1 // pred_check
      _
    $region47: #{neuroflex_forward.1} parent=1 // pred_check_branch
      %2014 = sbr.rel (0) target = $region49
    $region48: #{neuroflex_forward.1} parent=1 // pred_region
      %2015 = dma.done [#allocation4], 128
    $region49: #{neuroflex_forward.1} parent=1 // pred_fallthru
      _
    // Predicated region
    $region50: #{neuroflex_forward.1} parent=1 // pred_check
      _
    $region51: #{neuroflex_forward.1} parent=1 // pred_check_branch
      %2017 = sbr.rel (0) target = $region53
    $region52: #{neuroflex_forward.1} parent=1 // pred_region
      %2018 = dma.done [#allocation6], 256
    $region53: #{neuroflex_forward.1} parent=1 // pred_fallthru
      _
    // Predicated region
    $region54: #{neuroflex_forward.1} parent=1 // pred_check
      _
    $region55: #{neuroflex_forward.1} parent=1 // pred_check_branch
      %2020 = sbr.rel (0) target = $region57
    $region56: #{neuroflex_forward.1} parent=1 // pred_region
      %2021 = dma.done [#allocation6], 256
    $region57: #{neuroflex_forward.1} parent=1 // pred_fallthru
      _
    %2022 = vsyncpa [#allocation4], 1
    %2023 = vsyncpa [#allocation6], 1

</llo_original>
